<compile_context>
chip_gen: v7x
topology: tpu7x:2x2x1
jax: 0.10.0
libtpu: 0.0.40
codegen_flags: <defaults>
</compile_context>

<pallas_src>
import functools

import jax
import jax.numpy as jnp
from jax import lax
from jax.experimental import pallas as pl
from jax.experimental.pallas import tpu as pltpu


def _round_up(x, m):
    return ((x + m - 1) // m) * m


# ----------------------------------------------------------------------------
# Pallas kernel
# ----------------------------------------------------------------------------
def _char_cnn_highway_kernel(idx_ref, rsp_ref, tgt_ref, wbig_ref, bconv_ref,
                             wg_ref, bg_ref, wp_ref, bp_ref, o_ref):
    # idx_ref:   (bn, L_pad_a)      int32 char ids (conv/row padding = sentinel
    #                               id whose folded conv weights are all zero)
    # rsp_ref:   (L_pad_a, C_tot)   0/1 spread selector (pos p -> its V_p lanes)
    # tgt_ref:   (1, C_tot)         f32 compare target (lane % V_p)
    # wbig_ref:  (C_tot, N_big)     banded conv weight with embedding folded in
    # bconv_ref: (1, N_big)         conv bias tiled over t (0 on padded t groups)
    # wg/bg/wp/bp: highway gate / proj weights (in x out) and biases, f32
    # o_ref:     (bn, C_out)
    c_out = o_ref.shape[1]
    n_big = wbig_ref.shape[1]
    cdt = wbig_ref.dtype

    # (1) Spread each char id across its V_p contraction lanes with a tiny 0/1
    #     MXU matmul, then build the full-word one-hot with ONE compare
    #     (no per-tap slicing, no big-tensor relayouts).
    ids = idx_ref[...].astype(rsp_ref.dtype)
    spread = jnp.dot(ids, rsp_ref[...], preferred_element_type=jnp.float32)
    onehot = (jnp.abs(spread - tgt_ref[...]) < 0.5).astype(cdt)   # (bn, C_tot)

    # (2) Embedding + Conv1d over all taps and all output positions as a single
    #     contraction (band structure baked into wbig), then bias + ReLU.
    conv = jnp.dot(onehot, wbig_ref[...], preferred_element_type=jnp.float32)
    conv = jnp.maximum(conv + bconv_ref[...], 0.0)          # (bn, L_out_pad*C_out)

    # (3) max-over-time: halving tree over the t-major lane groups.  L_out is
    #     padded to a power of two in the wrapper, so every split except the
    #     final one lands on a 128-lane boundary (no relayout).  Padded groups
    #     are exactly 0 after ReLU, so they never win the max.
    x = conv
    width = n_big
    while width > 2 * c_out:
        half = width // 2
        x = jnp.maximum(x[:, :half], x[:, half:])
        width = half
    h = jnp.maximum(x[:, :c_out], x[:, c_out:])              # (bn, C_out)

    # (4) Highway: two small lane-aligned matmuls (gate, proj) kept in f32.
    gate = jax.nn.sigmoid(
        jnp.dot(h, wg_ref[...], preferred_element_type=jnp.float32)
        + bg_ref[...])
    proj = jnp.maximum(
        jnp.dot(h, wp_ref[...], preferred_element_type=jnp.float32)
        + bp_ref[...], 0.0)
    out = gate * proj + (1.0 - gate) * h

    # TODO(synk): dropout is identity here (eval mode); training-mode dropout
    # would use pltpu.prng_seed / pltpu.prng_random_bits.
    # TODO(synk): C_out=64 (<128 lanes) keeps the final store half-dense; the
    # kernel is MXU/VPU-bound so packed (bn//2, 128) stores were not worth the
    # in-kernel relayout.
    o_ref[...] = out.astype(o_ref.dtype)


# ----------------------------------------------------------------------------
# Wrapper: weight folding / banding, padding, pallas_call, reshape back.
# ----------------------------------------------------------------------------
@functools.partial(jax.jit, static_argnames=("padding", "block_n",
                                             "compute_dtype"))
def model_embeddings_forward(x_padded, params, *, padding=1, block_n=1024,
                             compute_dtype=jnp.bfloat16):
    """x_padded: (sent_len, batch, max_word_length) int char indices."""
    embed_tbl = params["embed"]            # (vocab, C_char)
    w_conv = params["w_conv"]              # (C_out, C_char, K)   PyTorch layout
    b_conv = params["b_conv"]              # (C_out,)
    w_gate = params["w_gate"]              # (C_out, C_out)       PyTorch out x in
    b_gate = params["b_gate"]
    w_proj = params["w_proj"]
    b_proj = params["b_proj"]

    sent_len, batch, mwl = x_padded.shape
    vocab, c_char = embed_tbl.shape
    c_out, _, ksize = w_conv.shape
    cd = jnp.dtype(compute_dtype)
    f32 = jnp.float32

    l_pad = mwl + 2 * padding              # conv input length ("same" padding)
    l_out = l_pad - ksize + 1              # conv output length
    assert l_out >= 1, "kernel_size too large for max_word_length + padding"

    # Sentinel id used for conv padding / row padding / alignment columns; its
    # folded conv weights are identically zero (rows [vocab:v_p) of e_ext).
    pad_id = vocab
    v_p = _round_up(vocab + 1, 8)          # per-position one-hot width
    assert v_p >= vocab + 1
    l_pad_a = _round_up(l_pad, 8)          # align spread-matmul contraction dim
    c_tot = l_pad * v_p                    # full-word contraction length
    l_out_pad = max(2, pl.next_power_of_2(l_out))
    n_big = l_out_pad * c_out

    n = sent_len * batch
    # Row-block size: multiple of 8 sublanes, no larger than the problem, and
    # clamped so the grid has >= 2 blocks when possible (v7x: 2 TensorCores
    # share the "parallel" grid axis).
    bn = max(8, min(int(block_n), _round_up(n, 8)))
    if _round_up(n, 8) >= 16:
        bn = min(bn, _round_up(pl.cdiv(n, 2), 8))
    bn = _round_up(bn, 8)
    n_padded = _round_up(n, bn)

    # ---- tiny host/XLA-side constant folding (once per call) -----------------
    idx = x_padded.reshape(n, mwl).astype(jnp.int32)
    idx = jnp.pad(idx, ((0, n_padded - n),
                        (padding, l_pad_a - mwl - padding)),
                  constant_values=pad_id)

    # Embedding folded into each conv tap; sentinel rows stay zero.
    e_ext = jnp.zeros((v_p, c_char), f32).at[:vocab].set(embed_tbl.astype(f32))
    w_taps = jnp.transpose(w_conv.astype(f32), (2, 1, 0))       # (K, C_char, C_out)
    w_fold = jnp.einsum("vc,kco->kvo", e_ext, w_taps)           # (K, V_p, C_out)

    # Banded full-word weight:
    #   w_big[(p,v),(t,c)] = w_fold[p-t, v, c]   if 0 <= p-t < K and t < L_out
    p_i = jnp.arange(l_pad)[:, None, None]
    t_i = jnp.arange(l_out_pad)[None, :, None]
    k_i = jnp.arange(ksize)[None, None, :]
    band = ((p_i == t_i + k_i) & (t_i < l_out)).astype(f32)     # (L_pad, L_out_pad, K)
    w_big = jnp.einsum("ptk,kvo->pvto", band, w_fold)           # (L_pad, V_p, T, C)
    w_big = w_big.reshape(c_tot, n_big).astype(cd)

    # Spread selector (position p -> lanes [p*v_p, (p+1)*v_p)) and compare target.
    j_i = jnp.arange(c_tot)
    r_spread = (j_i[None, :] // v_p == jnp.arange(l_pad_a)[:, None])
    # Keep the spread matmul exact: bf16 represents integers <= 256 exactly.
    sp_dt = cd if (vocab + 1) <= 256 else f32
    r_spread = r_spread.astype(sp_dt)                            # (L_pad_a, C_tot)
    tgt = (j_i % v_p).astype(f32).reshape(1, c_tot)

    # Conv bias tiled over output positions; zero on padded t groups so they
    # contribute exactly 0 after ReLU (safe under max-over-time).
    b_conv_t = jnp.where(jnp.arange(l_out_pad)[:, None] < l_out,
                         b_conv.astype(f32)[None, :], 0.0)
    b_conv_t = b_conv_t.reshape(1, n_big)

    w_g = w_gate.T.astype(f32)             # (C_out, C_out), in x out
    w_p = w_proj.T.astype(f32)
    b_g = b_gate.reshape(1, c_out).astype(f32)
    b_p = b_proj.reshape(1, c_out).astype(f32)

    # VMEM budget: derived from the actual per-block footprint, kept well under
    # v7x's 64 MiB physical VMEM.
    isz = cd.itemsize
    sp_isz = jnp.dtype(sp_dt).itemsize
    vmem_est = (2 * bn * l_pad_a * 4            # idx (double-buffered)
                + 2 * l_pad_a * c_tot * sp_isz  # spread selector
                + 2 * c_tot * n_big * isz       # banded conv weight
                + 2 * bn * c_out * 4            # output
                + bn * c_tot * (4 + isz)        # spread + one-hot
                + 3 * bn * n_big * 4            # conv + max-tree temporaries
                + (4 << 20))
    vmem_limit = int(min(max(vmem_est, 32 << 20), 48 << 20))

    grid = (n_padded // bn,)
    out = pl.pallas_call(
        _char_cnn_highway_kernel,
        out_shape=jax.ShapeDtypeStruct((n_padded, c_out), jnp.float32),
        grid_spec=pltpu.PrefetchScalarGridSpec(
            num_scalar_prefetch=0,
            grid=grid,
            in_specs=[
                pl.BlockSpec((bn, l_pad_a), lambda i: (i, 0)),
                pl.BlockSpec((l_pad_a, c_tot), lambda i: (0, 0)),
                pl.BlockSpec((1, c_tot), lambda i: (0, 0)),
                pl.BlockSpec((c_tot, n_big), lambda i: (0, 0)),
                pl.BlockSpec((1, n_big), lambda i: (0, 0)),
                pl.BlockSpec((c_out, c_out), lambda i: (0, 0)),
                pl.BlockSpec((1, c_out), lambda i: (0, 0)),
                pl.BlockSpec((c_out, c_out), lambda i: (0, 0)),
                pl.BlockSpec((1, c_out), lambda i: (0, 0)),
            ],
            out_specs=pl.BlockSpec((bn, c_out), lambda i: (i, 0)),
        ),
        compiler_params=pltpu.CompilerParams(
            dimension_semantics=("parallel",),
            vmem_limit_bytes=vmem_limit),
    )(idx, r_spread, tgt, w_big, b_conv_t, w_g, b_g, w_p, b_p)

    return out[:n].reshape(sent_len, batch, c_out)


# ----------------------------------------------------------------------------
# Pure-JAX reference (same semantics as the PyTorch forward, eval mode).
# ----------------------------------------------------------------------------
def reference_forward(x_padded, params, *, padding=1):
    embed_tbl = params["embed"]
    w_conv, b_conv = params["w_conv"], params["b_conv"]
    w_gate, b_gate = params["w_gate"], params["b_gate"]
    w_proj, b_proj = params["w_proj"], params["b_proj"]

    sent_len, batch, mwl = x_padded.shape
    c_char = embed_tbl.shape[1]
    c_out = w_conv.shape[0]

    x_emb = jnp.take(embed_tbl, x_padded, axis=0)                 # (S, B, L, C)
    x_ncl = jnp.transpose(x_emb, (0, 1, 3, 2)).reshape(
        sent_len * batch, c_char, mwl)
    x_conv = lax.conv_general_dilated(
        x_ncl, w_conv, window_strides=(1,), padding=[(padding, padding)],
        dimension_numbers=("NCH", "OIH", "NCH"))
    x_conv = jnp.maximum(x_conv + b_conv.reshape(1, c_out, 1), 0.0)
    h = jnp.max(x_conv, axis=-1)                                  # (N, C_out)
    gate = jax.nn.sigmoid(h @ w_gate.T + b_gate)
    proj = jnp.maximum(h @ w_proj.T + b_proj, 0.0)
    hw = gate * proj + (1.0 - gate) * h
    return hw.reshape(sent_len, batch, c_out)


# ----------------------------------------------------------------------------
# Main
# ----------------------------------------------------------------------------
if __name__ == "__main__":
    word_embed_size = 64      # C_out
    char_embed_size = 32      # C_in
    vocab_size = 30           # len(vocabentry.char2id)
    kernel_size = 5
    padding = 1

    key = jax.random.PRNGKey(0)
    (k_emb, k_wc, k_bc, k_wg, k_bg,
     k_wp, k_bp, k_x1, k_x2, k_x3) = jax.random.split(key, 10)

    params = {
        "embed": jax.random.normal(k_emb, (vocab_size, char_embed_size),
                                   jnp.float32),
        "w_conv": 0.1 * jax.random.normal(
            k_wc, (word_embed_size, char_embed_size, kernel_size), jnp.float32),
        "b_conv": 0.1 * jax.random.normal(k_bc, (word_embed_size,), jnp.float32),
        "w_gate": 0.1 * jax.random.normal(
            k_wg, (word_embed_size, word_embed_size), jnp.float32),
        "b_gate": 0.1 * jax.random.normal(k_bg, (word_embed_size,), jnp.float32),
        "w_proj": 0.1 * jax.random.normal(
            k_wp, (word_embed_size, word_embed_size), jnp.float32),
        "b_proj": 0.1 * jax.random.normal(k_bp, (word_embed_size,), jnp.float32),
    }

    # Case 1: tiny, single block, f32 conv operands -> tight numerical check
    # of the merged-contraction kernel math.
    sent_len, batch, max_word_length = 4, 2, 16
    x1 = jax.random.randint(
        k_x1, (sent_len, batch, max_word_length), 0, vocab_size, dtype=jnp.int32)
    out1 = jax.block_until_ready(
        model_embeddings_forward(x1, params, padding=padding,
                                 compute_dtype=jnp.float32))
    ref1 = reference_forward(x1, params, padding=padding)
    assert out1.shape == (sent_len, batch, word_embed_size), out1.shape
    assert jnp.allclose(out1, ref1, atol=1e-4, rtol=1e-4), (
        float(jnp.max(jnp.abs(out1 - ref1))))

    # Case 2: multi-block grid (n=320 -> 2 blocks), default bf16 conv operands.
    sent_len2, batch2 = 20, 16
    x2 = jax.random.randint(
        k_x2, (sent_len2, batch2, max_word_length), 0, vocab_size,
        dtype=jnp.int32)
    out2 = jax.block_until_ready(
        model_embeddings_forward(x2, params, padding=padding))
    ref2 = reference_forward(x2, params, padding=padding)
    assert out2.shape == (sent_len2, batch2, word_embed_size), out2.shape
    assert jnp.allclose(out2, ref2, atol=3e-2, rtol=3e-2), (
        float(jnp.max(jnp.abs(out2 - ref2))))

    # Case 3: larger N with row padding (n=2560 -> 3 blocks of 1024), bf16.
    sent_len3, batch3 = 40, 64
    x3 = jax.random.randint(
        k_x3, (sent_len3, batch3, max_word_length), 0, vocab_size,
        dtype=jnp.int32)
    out3 = jax.block_until_ready(
        model_embeddings_forward(x3, params, padding=padding))
    ref3 = reference_forward(x3, params, padding=padding)
    assert out3.shape == (sent_len3, batch3, word_embed_size), out3.shape
    assert jnp.allclose(out3, ref3, atol=3e-2, rtol=3e-2), (
        float(jnp.max(jnp.abs(out3 - ref3))))

    print("KERNEL_OK")
</pallas_src>

<mosaic_0001>
module attributes {stable_mosaic.version = 11 : i64} {
  func.func @_char_cnn_highway_kernel(%arg0: i32, %arg1: memref<8x24xi32, #tpu.memory_space<vmem>>, %arg2: memref<24x576xf32, #tpu.memory_space<vmem>>, %arg3: memref<1x576xf32, #tpu.memory_space<vmem>>, %arg4: memref<576x1024xf32, #tpu.memory_space<vmem>>, %arg5: memref<1x1024xf32, #tpu.memory_space<vmem>>, %arg6: memref<64x64xf32, #tpu.memory_space<vmem>>, %arg7: memref<1x64xf32, #tpu.memory_space<vmem>>, %arg8: memref<64x64xf32, #tpu.memory_space<vmem>>, %arg9: memref<1x64xf32, #tpu.memory_space<vmem>>, %arg10: memref<8x64xf32, #tpu.memory_space<vmem>>) attributes {dimension_semantics = [#tpu.dimension_semantics<parallel>], iteration_bounds = array<i64: 1>, scalar_prefetch = 0 : i64, scratch_operands = 0 : i64, tpu.core_type = #tpu.core_type<tc>, window_params = [{transform_indices = @transform_0, window_bounds = array<i64: 8, 24>}, {pipeline_mode = #tpu.pipeline_mode<synchronous>, transform_indices = @transform_1, window_bounds = array<i64: 24, 576>}, {pipeline_mode = #tpu.pipeline_mode<synchronous>, transform_indices = @transform_2, window_bounds = array<i64: 1, 576>}, {pipeline_mode = #tpu.pipeline_mode<synchronous>, transform_indices = @transform_3, window_bounds = array<i64: 576, 1024>}, {pipeline_mode = #tpu.pipeline_mode<synchronous>, transform_indices = @transform_4, window_bounds = array<i64: 1, 1024>}, {pipeline_mode = #tpu.pipeline_mode<synchronous>, transform_indices = @transform_5, window_bounds = array<i64: 64, 64>}, {pipeline_mode = #tpu.pipeline_mode<synchronous>, transform_indices = @transform_6, window_bounds = array<i64: 1, 64>}, {pipeline_mode = #tpu.pipeline_mode<synchronous>, transform_indices = @transform_7, window_bounds = array<i64: 64, 64>}, {pipeline_mode = #tpu.pipeline_mode<synchronous>, transform_indices = @transform_8, window_bounds = array<i64: 1, 64>}, {transform_indices = @transform_9, window_bounds = array<i64: 8, 64>}]} {
    %c0 = arith.constant 0 : index
    %c0_0 = arith.constant 0 : index
    %0 = vector.load %arg1[%c0, %c0_0] : memref<8x24xi32, #tpu.memory_space<vmem>>, vector<8x24xi32>
    %1 = arith.sitofp %0 : vector<8x24xi32> to vector<8x24xf32>
    %c0_1 = arith.constant 0 : index
    %c0_2 = arith.constant 0 : index
    %2 = vector.load %arg2[%c0_1, %c0_2] : memref<24x576xf32, #tpu.memory_space<vmem>>, vector<24x576xf32>
    %cst = arith.constant dense<0.000000e+00> : vector<8x576xf32>
    %3 = tpu.matmul %1, %2, %cst {dimension_numbers = #tpu.dot_dimension_numbers<[1], [0], [0], [1], [0, 0, 1, 1], [], []>} : vector<8x24xf32>, vector<24x576xf32>, vector<8x576xf32> -> vector<8x576xf32>
    %c0_3 = arith.constant 0 : index
    %c0_4 = arith.constant 0 : index
    %4 = vector.load %arg3[%c0_3, %c0_4] : memref<1x576xf32, #tpu.memory_space<vmem>>, vector<1x576xf32>
    %5 = vector.broadcast %4 : vector<1x576xf32> to vector<8x576xf32>
    %6 = arith.subf %3, %5 : vector<8x576xf32>
    %7 = math.absf %6 : vector<8x576xf32>
    %cst_5 = arith.constant 5.000000e-01 : f32
    %8 = vector.broadcast %cst_5 : f32 to vector<8x576xf32>
    %9 = arith.cmpf olt, %7, %8 : vector<8x576xf32>
    %10 = arith.extui %9 : vector<8x576xi1> to vector<8x576xi32>
    %11 = arith.sitofp %10 : vector<8x576xi32> to vector<8x576xf32>
    %c0_6 = arith.constant 0 : index
    %c0_7 = arith.constant 0 : index
    %12 = vector.load %arg4[%c0_6, %c0_7] : memref<576x1024xf32, #tpu.memory_space<vmem>>, vector<576x1024xf32>
    %cst_8 = arith.constant dense<0.000000e+00> : vector<8x1024xf32>
    %13 = tpu.matmul %11, %12, %cst_8 {dimension_numbers = #tpu.dot_dimension_numbers<[1], [0], [0], [1], [0, 0, 1, 1], [], []>} : vector<8x576xf32>, vector<576x1024xf32>, vector<8x1024xf32> -> vector<8x1024xf32>
    %c0_9 = arith.constant 0 : index
    %c0_10 = arith.constant 0 : index
    %14 = vector.load %arg5[%c0_9, %c0_10] : memref<1x1024xf32, #tpu.memory_space<vmem>>, vector<1x1024xf32>
    %15 = vector.broadcast %14 : vector<1x1024xf32> to vector<8x1024xf32>
    %16 = arith.addf %13, %15 : vector<8x1024xf32>
    %cst_11 = arith.constant 0.000000e+00 : f32
    %17 = vector.broadcast %cst_11 : f32 to vector<8x1024xf32>
    %18 = arith.maximumf %16, %17 : vector<8x1024xf32>
    %19 = vector.extract_strided_slice %18 {offsets = [0, 0], sizes = [8, 512], strides = [1, 1]} : vector<8x1024xf32> to vector<8x512xf32>
    %20 = vector.extract_strided_slice %18 {offsets = [0, 512], sizes = [8, 512], strides = [1, 1]} : vector<8x1024xf32> to vector<8x512xf32>
    %21 = arith.maximumf %19, %20 : vector<8x512xf32>
    %22 = vector.extract_strided_slice %21 {offsets = [0, 0], sizes = [8, 256], strides = [1, 1]} : vector<8x512xf32> to vector<8x256xf32>
    %23 = vector.extract_strided_slice %21 {offsets = [0, 256], sizes = [8, 256], strides = [1, 1]} : vector<8x512xf32> to vector<8x256xf32>
    %24 = arith.maximumf %22, %23 : vector<8x256xf32>
    %25 = vector.extract_strided_slice %24 {offsets = [0, 0], sizes = [8, 128], strides = [1, 1]} : vector<8x256xf32> to vector<8x128xf32>
    %26 = vector.extract_strided_slice %24 {offsets = [0, 128], sizes = [8, 128], strides = [1, 1]} : vector<8x256xf32> to vector<8x128xf32>
    %27 = arith.maximumf %25, %26 : vector<8x128xf32>
    %28 = vector.extract_strided_slice %27 {offsets = [0, 0], sizes = [8, 64], strides = [1, 1]} : vector<8x128xf32> to vector<8x64xf32>
    %29 = vector.extract_strided_slice %27 {offsets = [0, 64], sizes = [8, 64], strides = [1, 1]} : vector<8x128xf32> to vector<8x64xf32>
    %30 = arith.maximumf %28, %29 : vector<8x64xf32>
    %c0_12 = arith.constant 0 : index
    %c0_13 = arith.constant 0 : index
    %31 = vector.load %arg6[%c0_12, %c0_13] : memref<64x64xf32, #tpu.memory_space<vmem>>, vector<64x64xf32>
    %cst_14 = arith.constant dense<0.000000e+00> : vector<8x64xf32>
    %32 = tpu.matmul %30, %31, %cst_14 {dimension_numbers = #tpu.dot_dimension_numbers<[1], [0], [0], [1], [0, 0, 1, 1], [], []>} : vector<8x64xf32>, vector<64x64xf32>, vector<8x64xf32> -> vector<8x64xf32>
    %c0_15 = arith.constant 0 : index
    %c0_16 = arith.constant 0 : index
    %33 = vector.load %arg7[%c0_15, %c0_16] : memref<1x64xf32, #tpu.memory_space<vmem>>, vector<1x64xf32>
    %34 = vector.broadcast %33 : vector<1x64xf32> to vector<8x64xf32>
    %35 = arith.addf %32, %34 : vector<8x64xf32>
    %36 = arith.negf %35 : vector<8x64xf32>
    %37 = math.exp %36 : vector<8x64xf32>
    %cst_17 = arith.constant 1.000000e+00 : f32
    %38 = vector.broadcast %cst_17 : f32 to vector<8x64xf32>
    %39 = arith.addf %38, %37 : vector<8x64xf32>
    %40 = arith.divf %38, %39 : vector<8x64xf32>
    %c0_18 = arith.constant 0 : index
    %c0_19 = arith.constant 0 : index
    %41 = vector.load %arg8[%c0_18, %c0_19] : memref<64x64xf32, #tpu.memory_space<vmem>>, vector<64x64xf32>
    %cst_20 = arith.constant dense<0.000000e+00> : vector<8x64xf32>
    %42 = tpu.matmul %30, %41, %cst_20 {dimension_numbers = #tpu.dot_dimension_numbers<[1], [0], [0], [1], [0, 0, 1, 1], [], []>} : vector<8x64xf32>, vector<64x64xf32>, vector<8x64xf32> -> vector<8x64xf32>
    %c0_21 = arith.constant 0 : index
    %c0_22 = arith.constant 0 : index
    %43 = vector.load %arg9[%c0_21, %c0_22] : memref<1x64xf32, #tpu.memory_space<vmem>>, vector<1x64xf32>
    %44 = vector.broadcast %43 : vector<1x64xf32> to vector<8x64xf32>
    %45 = arith.addf %42, %44 : vector<8x64xf32>
    %cst_23 = arith.constant 0.000000e+00 : f32
    %46 = vector.broadcast %cst_23 : f32 to vector<8x64xf32>
    %47 = arith.maximumf %45, %46 : vector<8x64xf32>
    %48 = arith.mulf %40, %47 : vector<8x64xf32>
    %cst_24 = arith.constant 1.000000e+00 : f32
    %49 = vector.broadcast %cst_24 : f32 to vector<8x64xf32>
    %50 = arith.subf %49, %40 : vector<8x64xf32>
    %51 = arith.mulf %50, %30 : vector<8x64xf32>
    %52 = arith.addf %48, %51 : vector<8x64xf32>
    %c0_25 = arith.constant 0 : index
    %c0_26 = arith.constant 0 : index
    %53 = vector.load %arg10[%c0_25, %c0_26] : memref<8x64xf32, #tpu.memory_space<vmem>>, vector<8x64xf32>
    tpu.vector_store %arg10[%c0_25, %c0_26], %52 {strides = array<i32>} : memref<8x64xf32, #tpu.memory_space<vmem>>, vector<8x64xf32>,
    return
  }
  func.func @transform_0(%arg0: i32) -> (i32, i32) {
    %c0_i32 = arith.constant 0 : i32
    %c0_i32_0 = arith.constant 0 : i32
    return %arg0, %c0_i32 : i32, i32
  }
  func.func @transform_1(%arg0: i32) -> (i32, i32) {
    %c0_i32 = arith.constant 0 : i32
    %c0_i32_0 = arith.constant 0 : i32
    %c0_i32_1 = arith.constant 0 : i32
    return %c0_i32, %c0_i32_0 : i32, i32
  }
  func.func @transform_2(%arg0: i32) -> (i32, i32) {
    %c0_i32 = arith.constant 0 : i32
    %c0_i32_0 = arith.constant 0 : i32
    %c0_i32_1 = arith.constant 0 : i32
    return %c0_i32, %c0_i32_0 : i32, i32
  }
  func.func @transform_3(%arg0: i32) -> (i32, i32) {
    %c0_i32 = arith.constant 0 : i32
    %c0_i32_0 = arith.constant 0 : i32
    %c0_i32_1 = arith.constant 0 : i32
    return %c0_i32, %c0_i32_0 : i32, i32
  }
  func.func @transform_4(%arg0: i32) -> (i32, i32) {
    %c0_i32 = arith.constant 0 : i32
    %c0_i32_0 = arith.constant 0 : i32
    %c0_i32_1 = arith.constant 0 : i32
    return %c0_i32, %c0_i32_0 : i32, i32
  }
  func.func @transform_5(%arg0: i32) -> (i32, i32) {
    %c0_i32 = arith.constant 0 : i32
    %c0_i32_0 = arith.constant 0 : i32
    %c0_i32_1 = arith.constant 0 : i32
    return %c0_i32, %c0_i32_0 : i32, i32
  }
  func.func @transform_6(%arg0: i32) -> (i32, i32) {
    %c0_i32 = arith.constant 0 : i32
    %c0_i32_0 = arith.constant 0 : i32
    %c0_i32_1 = arith.constant 0 : i32
    return %c0_i32, %c0_i32_0 : i32, i32
  }
  func.func @transform_7(%arg0: i32) -> (i32, i32) {
    %c0_i32 = arith.constant 0 : i32
    %c0_i32_0 = arith.constant 0 : i32
    %c0_i32_1 = arith.constant 0 : i32
    return %c0_i32, %c0_i32_0 : i32, i32
  }
  func.func @transform_8(%arg0: i32) -> (i32, i32) {
    %c0_i32 = arith.constant 0 : i32
    %c0_i32_0 = arith.constant 0 : i32
    %c0_i32_1 = arith.constant 0 : i32
    return %c0_i32, %c0_i32_0 : i32, i32
  }
  func.func @transform_9(%arg0: i32) -> (i32, i32) {
    %c0_i32 = arith.constant 0 : i32
    %c0_i32_0 = arith.constant 0 : i32
    return %arg0, %c0_i32 : i32, i32
  }
}

</mosaic_0001>

<llo_original>
// kernel: model_embeddings_forward.1
$region0: #{model_embeddings_forward.1}
  #allocation0 [shape = 'u32[]', space=smem, size = 0x4, offset = 0x4, fixed_abs, tag = 'smem constant byte address 0x4 - core index']
  #allocation1 [shape = 'u32[144,128]{1,0:T(1,128)}', space=vmem, size = 0x12000, scoped, tag = 'internal scratch']
  %s0 = inlined_call_operand.vmem [shape: s32[8,24], index: 0, kind: input, shape index: {}]
  %s1 = inlined_call_operand.vmem [shape: f32[24,576], index: 1, kind: input, shape index: {}]
  %s2 = inlined_call_operand.vmem [shape: f32[1,576], index: 2, kind: input, shape index: {}]
  %s3 = inlined_call_operand.vmem [shape: f32[576,1024], index: 3, kind: input, shape index: {}]
  %s4 = inlined_call_operand.vmem [shape: f32[1,1024], index: 4, kind: input, shape index: {}]
  %s5 = inlined_call_operand.vmem [shape: f32[64,64], index: 5, kind: input, shape index: {}]
  %s6 = inlined_call_operand.vmem [shape: f32[1,64], index: 6, kind: input, shape index: {}]
  %s7 = inlined_call_operand.vmem [shape: f32[64,64], index: 7, kind: input, shape index: {}]
  %s8 = inlined_call_operand.vmem [shape: f32[1,64], index: 8, kind: input, shape index: {}]
  %s9 = inlined_call_operand.hbm [shape: f32[8,64], index: 9, kind: output, shape index: {}]
  %s10 = sld [smem:[#allocation0]]
  $region46: #{model_embeddings_forward.1} parent=0
    _
  %s12 = ssub.s32 1, %s10
  %s13 = scalar_select 0, %s12, %s10
  $region1: #{model_embeddings_forward.1} parent=0
    #allocation2 [shape = 'u8[4096]{0}', space=vmem, size = 0x1000, scoped, tag = 'output window, operand 0, single buffered']
    #allocation3 [shape = 's32[1]{0}', space=sflag, size = 0x4, scoped, tag = 'scoped memory for model_embeddings_forward.1']
    %14 = vsyncpa [#allocation3], 0
    // Predicated region
    $region2: #{model_embeddings_forward.1} parent=1 // pred_check
      _
    $region3: #{model_embeddings_forward.1} parent=1 // pred_check_branch
      %16 = sbr.rel (0) target = $region5
    $region4: #{model_embeddings_forward.1} parent=1 // pred_region
      _
    $region5: #{model_embeddings_forward.1} parent=1 // pred_fallthru
      _
    // Predicated region
    $region6: #{model_embeddings_forward.1} parent=1 // pred_check
      _
    $region7: #{model_embeddings_forward.1} parent=1 // pred_check_branch
      %18 = sbr.rel (0) target = $region9
    $region8: #{model_embeddings_forward.1} parent=1 // pred_region
      _
    $region9: #{model_embeddings_forward.1} parent=1 // pred_fallthru
      _
    // Predicated region
    $region10: #{model_embeddings_forward.1} parent=1 // pred_check
      _
    $region11: #{model_embeddings_forward.1} parent=1 // pred_check_branch
      %20 = sbr.rel (0) target = $region13
    $region12: #{model_embeddings_forward.1} parent=1 // pred_region
      _
    $region13: #{model_embeddings_forward.1} parent=1 // pred_fallthru
      _
    // Predicated region
    $region14: #{model_embeddings_forward.1} parent=1 // pred_check
      _
    $region15: #{model_embeddings_forward.1} parent=1 // pred_check_branch
      %22 = sbr.rel (0) target = $region17
    $region16: #{model_embeddings_forward.1} parent=1 // pred_region
      _
    $region17: #{model_embeddings_forward.1} parent=1 // pred_fallthru
      _
    // Predicated region
    $region18: #{model_embeddings_forward.1} parent=1 // pred_check
      _
    $region19: #{model_embeddings_forward.1} parent=1 // pred_check_branch
      %24 = sbr.rel (0) target = $region21
    $region20: #{model_embeddings_forward.1} parent=1 // pred_region
      _
    $region21: #{model_embeddings_forward.1} parent=1 // pred_fallthru
      _
    // Predicated region
    $region22: #{model_embeddings_forward.1} parent=1 // pred_check
      _
    $region23: #{model_embeddings_forward.1} parent=1 // pred_check_branch
      %26 = sbr.rel (0) target = $region25
    $region24: #{model_embeddings_forward.1} parent=1 // pred_region
      _
    $region25: #{model_embeddings_forward.1} parent=1 // pred_fallthru
      _
    // Predicated region
    $region26: #{model_embeddings_forward.1} parent=1 // pred_check
      _
    $region27: #{model_embeddings_forward.1} parent=1 // pred_check_branch
      %28 = sbr.rel (0) target = $region29
    $region28: #{model_embeddings_forward.1} parent=1 // pred_region
      _
    $region29: #{model_embeddings_forward.1} parent=1 // pred_fallthru
      _
    // Predicated region
    $region30: #{model_embeddings_forward.1} parent=1 // pred_check
      _
    $region31: #{model_embeddings_forward.1} parent=1 // pred_check_branch
      %30 = sbr.rel (0) target = $region33
    $region32: #{model_embeddings_forward.1} parent=1 // pred_region
      _
    $region33: #{model_embeddings_forward.1} parent=1 // pred_fallthru
      _
    // Predicated region
    $region34: #{model_embeddings_forward.1} parent=1 // pred_check
      _
    $region35: #{model_embeddings_forward.1} parent=1 // pred_check_branch
      %32 = sbr.rel (0) target = $region37
    $region36: #{model_embeddings_forward.1} parent=1 // pred_region
      _
    $region37: #{model_embeddings_forward.1} parent=1 // pred_fallthru
      _
    %v33 = vld [vmem:[%s0] sm:$0xff]
    %v34 = vcvt.s32.f32 %v33
    %v35 = vld [vmem:[%s1] sm:$0xff]
    %v36 = vld [vmem:[%s1 + $0x8] sm:$0xff]
    %v37 = vld [vmem:[%s1 + $0x10] sm:$0xff]
    %v38 = vld [vmem:[%s1 + $0x18] sm:$0xff]
    %v39 = vld [vmem:[%s1 + $0x20] sm:$0xff]
    %v40 = vld [vmem:[%s1 + $0x28] sm:$0xff]
    %v41 = vld [vmem:[%s1 + $0x30] sm:$0xff]
    %v42 = vld [vmem:[%s1 + $0x38] sm:$0xff]
    %v43 = vld [vmem:[%s1 + $0x40] sm:$0xff]
    %v44 = vld [vmem:[%s1 + $0x48] sm:$0xff]
    %v45 = vld [vmem:[%s1 + $0x50] sm:$0xff]
    %v46 = vld [vmem:[%s1 + $0x58] sm:$0xff]
    %v47 = vld [vmem:[%s1 + $0x60] sm:$0xff]
    %v48 = vld [vmem:[%s1 + $0x68] sm:$0xff]
    %v49 = vld [vmem:[%s1 + $0x70] sm:$0xff]
    %vm50 = vcmask 195584
    %v52 = vsel %vm50, %v34, 0
    %54 = vmatprep.subr.mxu0 %v36
    %55 = vmatpush1.msra.mxu0 %v35
    %56 = vmatprep.subr.mxu0 %v41
    %57 = vmatpush1.msra.mxu0 %v40
    %58 = vmatprep.subr.mxu0 %v46
    %59 = vmatpush1.msra.mxu0 %v45
    %60 = vmatprep.subr.mxu0 0.0
    %61 = vmatpush1.msra.mxu0 0.0
    %62 = vmatprep.subr.mxu0 0.0
    %63 = vmatpush1.msra.mxu0 0.0
    %64 = vmatprep.subr.mxu0 0.0
    %65 = vmatpush1.msra.mxu0 0.0
    %66 = vmatprep.subr.mxu0 0.0
    %67 = vmatpush1.msra.mxu0 0.0
    %68 = vmatprep.subr.mxu0 0.0
    %69 = vmatpush1.msra.mxu0 0.0
    %70 = vmatprep.subr.mxu0 0.0
    %71 = vmatpush1.msra.mxu0 0.0
    %72 = vmatprep.subr.mxu0 0.0
    %73 = vmatpush1.msra.mxu0 0.0
    %74 = vmatprep.subr.mxu0 0.0
    %75 = vmatpush1.msra.mxu0 0.0
    %76 = vmatprep.subr.mxu0 0.0
    %77 = vmatpush1.msra.mxu0 0.0
    %78 = vmatprep.subr.mxu0 0.0
    %79 = vmatpush1.msra.mxu0 0.0
    %80 = vmatprep.subr.mxu0 0.0
    %81 = vmatpush1.msra.mxu0 0.0
    %82 = vmatprep.subr.mxu0 0.0
    %83 = vmatpush1.msra.mxu0 0.0
    %84 = vmatprep.subr.mxu0 0.0
    %85 = vmatpush1.msra.mxu0 0.0
    %86 = vmatprep.subr.mxu0 0.0
    %87 = vmatpush1.msra.mxu0 0.0
    %88 = vmatprep.subr.mxu0 0.0
    %89 = vmatpush1.msra.mxu0 0.0
    %90 = vmatprep.subr.mxu0 0.0
    %91 = vmatpush1.msra.mxu0 0.0
    %92 = vmatprep.subr.mxu0 0.0
    %93 = vmatpush1.msra.mxu0 0.0
    %94 = vmatprep.subr.mxu0 0.0
    %95 = vmatpush1.msra.mxu0 0.0
    %96 = vmatprep.subr.mxu0 0.0
    %97 = vmatpush1.msra.mxu0 0.0
    %98 = vmatprep.subr.mxu0 0.0
    %99 = vmatpush1.msra.mxu0 0.0
    %100 = vmatprep.subr.mxu0 0.0
    %101 = vmatpush1.msra.mxu0 0.0
    %102 = vmatprep.subr.mxu0 0.0
    %103 = vmatpush1.msra.mxu0 0.0
    %104 = vmatprep.subr.mxu0 0.0
    %105 = vmatpush1.msra.mxu0 0.0
    %106 = vmatprep.subr.mxu0 0.0
    %107 = vmatpush1.msra.mxu0 0.0
    %108 = vmatprep.subr.mxu0 0.0
    %109 = vmatpush1.msra.mxu0 0.0
    %110 = vmatprep.subr.mxu0 0.0
    %111 = vmatpush1.msra.mxu0 0.0
    %112 = vmatprep.subr.mxu0 0.0
    %113 = vmatpush1.msra.mxu0 0.0
    %114 = vmatprep.subr.mxu0 0.0
    %115 = vmatpush1.msra.mxu0 0.0
    %116 = vmatprep.subr.mxu0 0.0
    %117 = vmatpush1.msra.mxu0 0.0
    %118 = vmatprep.mubr.f32.mxu0 0.0
    %119 = vmatmul.mubr.f32.gmra.mrb[0].mxu0 %v52
    %v120 = vpop.f32.mrb[0].mxu0
    %v121 = vadd.f32 0.0, %v120
    %v122 = vpop.f32.mrb[0].mxu0
    %v123 = vadd.f32 0.0, %v122
    %124 = vdwg.mxu0
    %125 = vmatprep.subr.mxu0 %v38
    %126 = vmatpush1.msra.mxu0 %v37
    %127 = vmatprep.subr.mxu0 %v43
    %128 = vmatpush1.msra.mxu0 %v42
    %129 = vmatprep.subr.mxu0 %v48
    %130 = vmatpush1.msra.mxu0 %v47
    %131 = vmatprep.subr.mxu0 0.0
    %132 = vmatpush1.msra.mxu0 0.0
    %133 = vmatprep.subr.mxu0 0.0
    %134 = vmatpush1.msra.mxu0 0.0
    %135 = vmatprep.subr.mxu0 0.0
    %136 = vmatpush1.msra.mxu0 0.0
    %137 = vmatprep.subr.mxu0 0.0
    %138 = vmatpush1.msra.mxu0 0.0
    %139 = vmatprep.subr.mxu0 0.0
    %140 = vmatpush1.msra.mxu0 0.0
    %141 = vmatprep.subr.mxu0 0.0
    %142 = vmatpush1.msra.mxu0 0.0
    %143 = vmatprep.subr.mxu0 0.0
    %144 = vmatpush1.msra.mxu0 0.0
    %145 = vmatprep.subr.mxu0 0.0
    %146 = vmatpush1.msra.mxu0 0.0
    %147 = vmatprep.subr.mxu0 0.0
    %148 = vmatpush1.msra.mxu0 0.0
    %149 = vmatprep.subr.mxu0 0.0
    %150 = vmatpush1.msra.mxu0 0.0
    %151 = vmatprep.subr.mxu0 0.0
    %152 = vmatpush1.msra.mxu0 0.0
    %153 = vmatprep.subr.mxu0 0.0
    %154 = vmatpush1.msra.mxu0 0.0
    %155 = vmatprep.subr.mxu0 0.0
    %156 = vmatpush1.msra.mxu0 0.0
    %157 = vmatprep.subr.mxu0 0.0
    %158 = vmatpush1.msra.mxu0 0.0
    %159 = vmatprep.subr.mxu0 0.0
    %160 = vmatpush1.msra.mxu0 0.0
    %161 = vmatprep.subr.mxu0 0.0
    %162 = vmatpush1.msra.mxu0 0.0
    %163 = vmatprep.subr.mxu0 0.0
    %164 = vmatpush1.msra.mxu0 0.0
    %165 = vmatprep.subr.mxu0 0.0
    %166 = vmatpush1.msra.mxu0 0.0
    %167 = vmatprep.subr.mxu0 0.0
    %168 = vmatpush1.msra.mxu0 0.0
    %169 = vmatprep.subr.mxu0 0.0
    %170 = vmatpush1.msra.mxu0 0.0
    %171 = vmatprep.subr.mxu0 0.0
    %172 = vmatpush1.msra.mxu0 0.0
    %173 = vmatprep.subr.mxu0 0.0
    %174 = vmatpush1.msra.mxu0 0.0
    %175 = vmatprep.subr.mxu0 0.0
    %176 = vmatpush1.msra.mxu0 0.0
    %177 = vmatprep.subr.mxu0 0.0
    %178 = vmatpush1.msra.mxu0 0.0
    %179 = vmatprep.subr.mxu0 0.0
    %180 = vmatpush1.msra.mxu0 0.0
    %181 = vmatprep.subr.mxu0 0.0
    %182 = vmatpush1.msra.mxu0 0.0
    %183 = vmatprep.subr.mxu0 0.0
    %184 = vmatpush1.msra.mxu0 0.0
    %185 = vmatprep.subr.mxu0 0.0
    %186 = vmatpush1.msra.mxu0 0.0
    %187 = vmatprep.subr.mxu0 0.0
    %188 = vmatpush1.msra.mxu0 0.0
    %189 = vmatprep.mubr.f32.mxu0 0.0
    %190 = vmatmul.mubr.f32.gmra.mrb[0].mxu0 %v52
    %v191 = vpop.f32.mrb[0].mxu0
    %v192 = vadd.f32 0.0, %v191
    %v193 = vpop.f32.mrb[0].mxu0
    %v194 = vadd.f32 0.0, %v193
    %195 = vdwg.mxu0
    %196 = vmatprep.subr.mxu0 0.0
    %197 = vmatpush1.msra.mxu0 %v39
    %198 = vmatprep.subr.mxu0 0.0
    %199 = vmatpush1.msra.mxu0 %v44
    %200 = vmatprep.subr.mxu0 0.0
    %201 = vmatpush1.msra.mxu0 %v49
    %202 = vmatprep.subr.mxu0 0.0
    %203 = vmatpush1.msra.mxu0 0.0
    %204 = vmatprep.subr.mxu0 0.0
    %205 = vmatpush1.msra.mxu0 0.0
    %206 = vmatprep.subr.mxu0 0.0
    %207 = vmatpush1.msra.mxu0 0.0
    %208 = vmatprep.subr.mxu0 0.0
    %209 = vmatpush1.msra.mxu0 0.0
    %210 = vmatprep.subr.mxu0 0.0
    %211 = vmatpush1.msra.mxu0 0.0
    %212 = vmatprep.subr.mxu0 0.0
    %213 = vmatpush1.msra.mxu0 0.0
    %214 = vmatprep.subr.mxu0 0.0
    %215 = vmatpush1.msra.mxu0 0.0
    %216 = vmatprep.subr.mxu0 0.0
    %217 = vmatpush1.msra.mxu0 0.0
    %218 = vmatprep.subr.mxu0 0.0
    %219 = vmatpush1.msra.mxu0 0.0
    %220 = vmatprep.subr.mxu0 0.0
    %221 = vmatpush1.msra.mxu0 0.0
    %222 = vmatprep.subr.mxu0 0.0
    %223 = vmatpush1.msra.mxu0 0.0
    %224 = vmatprep.subr.mxu0 0.0
    %225 = vmatpush1.msra.mxu0 0.0
    %226 = vmatprep.subr.mxu0 0.0
    %227 = vmatpush1.msra.mxu0 0.0
    %228 = vmatprep.subr.mxu0 0.0
    %229 = vmatpush1.msra.mxu0 0.0
    %230 = vmatprep.subr.mxu0 0.0
    %231 = vmatpush1.msra.mxu0 0.0
    %232 = vmatprep.subr.mxu0 0.0
    %233 = vmatpush1.msra.mxu0 0.0
    %234 = vmatprep.subr.mxu0 0.0
    %235 = vmatpush1.msra.mxu0 0.0
    %236 = vmatprep.subr.mxu0 0.0
    %237 = vmatpush1.msra.mxu0 0.0
    %238 = vmatprep.subr.mxu0 0.0
    %239 = vmatpush1.msra.mxu0 0.0
    %240 = vmatprep.subr.mxu0 0.0
    %241 = vmatpush1.msra.mxu0 0.0
    %242 = vmatprep.subr.mxu0 0.0
    %243 = vmatpush1.msra.mxu0 0.0
    %244 = vmatprep.subr.mxu0 0.0
    %245 = vmatpush1.msra.mxu0 0.0
    %246 = vmatprep.subr.mxu0 0.0
    %247 = vmatpush1.msra.mxu0 0.0
    %248 = vmatprep.subr.mxu0 0.0
    %249 = vmatpush1.msra.mxu0 0.0
    %250 = vmatprep.subr.mxu0 0.0
    %251 = vmatpush1.msra.mxu0 0.0
    %252 = vmatprep.subr.mxu0 0.0
    %253 = vmatpush1.msra.mxu0 0.0
    %254 = vmatprep.subr.mxu0 0.0
    %255 = vmatpush1.msra.mxu0 0.0
    %256 = vmatprep.subr.mxu0 0.0
    %257 = vmatpush1.msra.mxu0 0.0
    %258 = vmatprep.subr.mxu0 0.0
    %259 = vmatpush1.msra.mxu0 0.0
    %260 = vmatprep.mubr.f32.mxu0 0.0
    %261 = vmatmul.mubr.f32.gmra.mrb[0].mxu0 %v52
    %v262 = vpop.f32.mrb[0].mxu0
    %v263 = vadd.f32 0.0, %v262
    %v264 = vpop.f32.mrb[0].mxu0
    %265 = vdwg.mxu0
    %v266 = vld [vmem:[%s2] sm:$0x1f]
    %v268 = vlaneseq
    %v269 = vshrl.u32 %v268, 7
    %v270 = vsub.s32 0, %v269
    %v271 = vrot.slane %v266, %v270
    %v272 = vlaneseq
    %v273 = vshrl.u32 %v272, 7
    %v274 = vsub.s32 1, %v273
    %v275 = vrot.slane %v266, %v274
    %v276 = vlaneseq
    %v277 = vshrl.u32 %v276, 7
    %v278 = vsub.s32 2, %v277
    %v279 = vrot.slane %v266, %v278
    %v280 = vlaneseq
    %v281 = vshrl.u32 %v280, 7
    %v282 = vsub.s32 3, %v281
    %v283 = vrot.slane %v266, %v282
    %v284 = vlaneseq
    %v285 = vshrl.u32 %v284, 7
    %v286 = vsub.s32 4, %v285
    %v287 = vrot.slane %v266, %v286
    %v293 = vsub.f32 %v121, %v271
    %v294 = vsub.f32 %v123, %v275
    %v295 = vsub.f32 %v192, %v279
    %v296 = vsub.f32 %v194, %v283
    %v297 = vsub.f32 %v263, %v287
    %v298 = vand.u32 2147483647, %v293
    %v299 = vand.u32 2147483647, %v294
    %v300 = vand.u32 2147483647, %v295
    %v301 = vand.u32 2147483647, %v296
    %v302 = vand.u32 2147483647, %v297
    %vm303 = vcmp.lt.f32.partialorder %v298, 0.5
    %vm304 = vcmp.lt.f32.partialorder %v299, 0.5
    %vm305 = vcmp.lt.f32.partialorder %v300, 0.5
    %vm306 = vcmp.lt.f32.partialorder %v301, 0.5
    %vm307 = vcmp.lt.f32.partialorder %v302, 0.5
    %v308 = vsel %vm303, 1, 0
    %v309 = vsel %vm304, 1, 0
    %v310 = vsel %vm305, 1, 0
    %v311 = vsel %vm306, 1, 0
    %v312 = vsel %vm307, 1, 0
    %v313 = vcvt.s32.f32 %v308
    %v314 = vcvt.s32.f32 %v309
    %v315 = vcvt.s32.f32 %v310
    %v316 = vcvt.s32.f32 %v311
    %v317 = vcvt.s32.f32 %v312
    %v318 = vld [vmem:[%s3] sm:$0xff]
    %v319 = vld [vmem:[%s3 + $0x8] sm:$0xff]
    %v320 = vld [vmem:[%s3 + $0x10] sm:$0xff]
    %v321 = vld [vmem:[%s3 + $0x18] sm:$0xff]
    %v322 = vld [vmem:[%s3 + $0x20] sm:$0xff]
    %v323 = vld [vmem:[%s3 + $0x28] sm:$0xff]
    %v324 = vld [vmem:[%s3 + $0x30] sm:$0xff]
    %v325 = vld [vmem:[%s3 + $0x38] sm:$0xff]
    %v326 = vld [vmem:[%s3 + $0x40] sm:$0xff]
    %v327 = vld [vmem:[%s3 + $0x48] sm:$0xff]
    %v328 = vld [vmem:[%s3 + $0x50] sm:$0xff]
    %v329 = vld [vmem:[%s3 + $0x58] sm:$0xff]
    %v330 = vld [vmem:[%s3 + $0x60] sm:$0xff]
    %v331 = vld [vmem:[%s3 + $0x68] sm:$0xff]
    %v332 = vld [vmem:[%s3 + $0x70] sm:$0xff]
    %v333 = vld [vmem:[%s3 + $0x78] sm:$0xff]
    %v334 = vld [vmem:[%s3 + $0x80] sm:$0xff]
    %v335 = vld [vmem:[%s3 + $0x88] sm:$0xff]
    %v336 = vld [vmem:[%s3 + $0x90] sm:$0xff]
    %v337 = vld [vmem:[%s3 + $0x98] sm:$0xff]
    %v338 = vld [vmem:[%s3 + $0xa0] sm:$0xff]
    %v339 = vld [vmem:[%s3 + $0xa8] sm:$0xff]
    %v340 = vld [vmem:[%s3 + $0xb0] sm:$0xff]
    %v341 = vld [vmem:[%s3 + $0xb8] sm:$0xff]
    %v342 = vld [vmem:[%s3 + $0xc0] sm:$0xff]
    %v343 = vld [vmem:[%s3 + $0xc8] sm:$0xff]
    %v344 = vld [vmem:[%s3 + $0xd0] sm:$0xff]
    %v345 = vld [vmem:[%s3 + $0xd8] sm:$0xff]
    %v346 = vld [vmem:[%s3 + $0xe0] sm:$0xff]
    %v347 = vld [vmem:[%s3 + $0xe8] sm:$0xff]
    %v348 = vld [vmem:[%s3 + $0xf0] sm:$0xff]
    %v349 = vld [vmem:[%s3 + $0xf8] sm:$0xff]
    %v350 = vld [vmem:[%s3 + $0x100] sm:$0xff]
    %v351 = vld [vmem:[%s3 + $0x108] sm:$0xff]
    %v352 = vld [vmem:[%s3 + $0x110] sm:$0xff]
    %v353 = vld [vmem:[%s3 + $0x118] sm:$0xff]
    %v354 = vld [vmem:[%s3 + $0x120] sm:$0xff]
    %v355 = vld [vmem:[%s3 + $0x128] sm:$0xff]
    %v356 = vld [vmem:[%s3 + $0x130] sm:$0xff]
    %v357 = vld [vmem:[%s3 + $0x138] sm:$0xff]
    %v358 = vld [vmem:[%s3 + $0x140] sm:$0xff]
    %v359 = vld [vmem:[%s3 + $0x148] sm:$0xff]
    %v360 = vld [vmem:[%s3 + $0x150] sm:$0xff]
    %v361 = vld [vmem:[%s3 + $0x158] sm:$0xff]
    %v362 = vld [vmem:[%s3 + $0x160] sm:$0xff]
    %v363 = vld [vmem:[%s3 + $0x168] sm:$0xff]
    %v364 = vld [vmem:[%s3 + $0x170] sm:$0xff]
    %v365 = vld [vmem:[%s3 + $0x178] sm:$0xff]
    %v366 = vld [vmem:[%s3 + $0x180] sm:$0xff]
    %v367 = vld [vmem:[%s3 + $0x188] sm:$0xff]
    %v368 = vld [vmem:[%s3 + $0x190] sm:$0xff]
    %v369 = vld [vmem:[%s3 + $0x198] sm:$0xff]
    %v370 = vld [vmem:[%s3 + $0x1a0] sm:$0xff]
    %v371 = vld [vmem:[%s3 + $0x1a8] sm:$0xff]
    %v372 = vld [vmem:[%s3 + $0x1b0] sm:$0xff]
    %v373 = vld [vmem:[%s3 + $0x1b8] sm:$0xff]
    %v374 = vld [vmem:[%s3 + $0x1c0] sm:$0xff]
    %v375 = vld [vmem:[%s3 + $0x1c8] sm:$0xff]
    %v376 = vld [vmem:[%s3 + $0x1d0] sm:$0xff]
    %v377 = vld [vmem:[%s3 + $0x1d8] sm:$0xff]
    %v378 = vld [vmem:[%s3 + $0x1e0] sm:$0xff]
    %v379 = vld [vmem:[%s3 + $0x1e8] sm:$0xff]
    %v380 = vld [vmem:[%s3 + $0x1f0] sm:$0xff]
    %v381 = vld [vmem:[%s3 + $0x1f8] sm:$0xff]
    %v382 = vld [vmem:[%s3 + $0x200] sm:$0xff]
    %v383 = vld [vmem:[%s3 + $0x208] sm:$0xff]
    %v384 = vld [vmem:[%s3 + $0x210] sm:$0xff]
    %v385 = vld [vmem:[%s3 + $0x218] sm:$0xff]
    %v386 = vld [vmem:[%s3 + $0x220] sm:$0xff]
    %v387 = vld [vmem:[%s3 + $0x228] sm:$0xff]
    %v388 = vld [vmem:[%s3 + $0x230] sm:$0xff]
    %v389 = vld [vmem:[%s3 + $0x238] sm:$0xff]
    %v390 = vld [vmem:[%s3 + $0x240] sm:$0xff]
    %v391 = vld [vmem:[%s3 + $0x248] sm:$0xff]
    %v392 = vld [vmem:[%s3 + $0x250] sm:$0xff]
    %v393 = vld [vmem:[%s3 + $0x258] sm:$0xff]
    %v394 = vld [vmem:[%s3 + $0x260] sm:$0xff]
    %v395 = vld [vmem:[%s3 + $0x268] sm:$0xff]
    %v396 = vld [vmem:[%s3 + $0x270] sm:$0xff]
    %v397 = vld [vmem:[%s3 + $0x278] sm:$0xff]
    %v398 = vld [vmem:[%s3 + $0x280] sm:$0xff]
    %v399 = vld [vmem:[%s3 + $0x288] sm:$0xff]
    %v400 = vld [vmem:[%s3 + $0x290] sm:$0xff]
    %v401 = vld [vmem:[%s3 + $0x298] sm:$0xff]
    %v402 = vld [vmem:[%s3 + $0x2a0] sm:$0xff]
    %v403 = vld [vmem:[%s3 + $0x2a8] sm:$0xff]
    %v404 = vld [vmem:[%s3 + $0x2b0] sm:$0xff]
    %v405 = vld [vmem:[%s3 + $0x2b8] sm:$0xff]
    %v406 = vld [vmem:[%s3 + $0x2c0] sm:$0xff]
    %v407 = vld [vmem:[%s3 + $0x2c8] sm:$0xff]
    %v408 = vld [vmem:[%s3 + $0x2d0] sm:$0xff]
    %v409 = vld [vmem:[%s3 + $0x2d8] sm:$0xff]
    %v410 = vld [vmem:[%s3 + $0x2e0] sm:$0xff]
    %v411 = vld [vmem:[%s3 + $0x2e8] sm:$0xff]
    %v412 = vld [vmem:[%s3 + $0x2f0] sm:$0xff]
    %v413 = vld [vmem:[%s3 + $0x2f8] sm:$0xff]
    %v414 = vld [vmem:[%s3 + $0x300] sm:$0xff]
    %v415 = vld [vmem:[%s3 + $0x308] sm:$0xff]
    %v416 = vld [vmem:[%s3 + $0x310] sm:$0xff]
    %v417 = vld [vmem:[%s3 + $0x318] sm:$0xff]
    %v418 = vld [vmem:[%s3 + $0x320] sm:$0xff]
    %v419 = vld [vmem:[%s3 + $0x328] sm:$0xff]
    %v420 = vld [vmem:[%s3 + $0x330] sm:$0xff]
    %v421 = vld [vmem:[%s3 + $0x338] sm:$0xff]
    %v422 = vld [vmem:[%s3 + $0x340] sm:$0xff]
    %v423 = vld [vmem:[%s3 + $0x348] sm:$0xff]
    %v424 = vld [vmem:[%s3 + $0x350] sm:$0xff]
    %v425 = vld [vmem:[%s3 + $0x358] sm:$0xff]
    %v426 = vld [vmem:[%s3 + $0x360] sm:$0xff]
    %v427 = vld [vmem:[%s3 + $0x368] sm:$0xff]
    %v428 = vld [vmem:[%s3 + $0x370] sm:$0xff]
    %v429 = vld [vmem:[%s3 + $0x378] sm:$0xff]
    %v430 = vld [vmem:[%s3 + $0x380] sm:$0xff]
    %v431 = vld [vmem:[%s3 + $0x388] sm:$0xff]
    %v432 = vld [vmem:[%s3 + $0x390] sm:$0xff]
    %v433 = vld [vmem:[%s3 + $0x398] sm:$0xff]
    %v434 = vld [vmem:[%s3 + $0x3a0] sm:$0xff]
    %v435 = vld [vmem:[%s3 + $0x3a8] sm:$0xff]
    %v436 = vld [vmem:[%s3 + $0x3b0] sm:$0xff]
    %v437 = vld [vmem:[%s3 + $0x3b8] sm:$0xff]
    %v438 = vld [vmem:[%s3 + $0x3c0] sm:$0xff]
    %v439 = vld [vmem:[%s3 + $0x3c8] sm:$0xff]
    %v440 = vld [vmem:[%s3 + $0x3d0] sm:$0xff]
    %v441 = vld [vmem:[%s3 + $0x3d8] sm:$0xff]
    %v442 = vld [vmem:[%s3 + $0x3e0] sm:$0xff]
    %v443 = vld [vmem:[%s3 + $0x3e8] sm:$0xff]
    %v444 = vld [vmem:[%s3 + $0x3f0] sm:$0xff]
    %v445 = vld [vmem:[%s3 + $0x3f8] sm:$0xff]
    %v446 = vld [vmem:[%s3 + $0x400] sm:$0xff]
    %v447 = vld [vmem:[%s3 + $0x408] sm:$0xff]
    %v448 = vld [vmem:[%s3 + $0x410] sm:$0xff]
    %v449 = vld [vmem:[%s3 + $0x418] sm:$0xff]
    %v450 = vld [vmem:[%s3 + $0x420] sm:$0xff]
    %v451 = vld [vmem:[%s3 + $0x428] sm:$0xff]
    %v452 = vld [vmem:[%s3 + $0x430] sm:$0xff]
    %v453 = vld [vmem:[%s3 + $0x438] sm:$0xff]
    %v454 = vld [vmem:[%s3 + $0x440] sm:$0xff]
    %v455 = vld [vmem:[%s3 + $0x448] sm:$0xff]
    %v456 = vld [vmem:[%s3 + $0x450] sm:$0xff]
    %v457 = vld [vmem:[%s3 + $0x458] sm:$0xff]
    %v458 = vld [vmem:[%s3 + $0x460] sm:$0xff]
    %v459 = vld [vmem:[%s3 + $0x468] sm:$0xff]
    %v460 = vld [vmem:[%s3 + $0x470] sm:$0xff]
    %v461 = vld [vmem:[%s3 + $0x478] sm:$0xff]
    %v462 = vld [vmem:[%s3 + $0x480] sm:$0xff]
    %v463 = vld [vmem:[%s3 + $0x488] sm:$0xff]
    %v464 = vld [vmem:[%s3 + $0x490] sm:$0xff]
    %v465 = vld [vmem:[%s3 + $0x498] sm:$0xff]
    %v466 = vld [vmem:[%s3 + $0x4a0] sm:$0xff]
    %v467 = vld [vmem:[%s3 + $0x4a8] sm:$0xff]
    %v468 = vld [vmem:[%s3 + $0x4b0] sm:$0xff]
    %v469 = vld [vmem:[%s3 + $0x4b8] sm:$0xff]
    %v470 = vld [vmem:[%s3 + $0x4c0] sm:$0xff]
    %v471 = vld [vmem:[%s3 + $0x4c8] sm:$0xff]
    %v472 = vld [vmem:[%s3 + $0x4d0] sm:$0xff]
    %v473 = vld [vmem:[%s3 + $0x4d8] sm:$0xff]
    %v474 = vld [vmem:[%s3 + $0x4e0] sm:$0xff]
    %v475 = vld [vmem:[%s3 + $0x4e8] sm:$0xff]
    %v476 = vld [vmem:[%s3 + $0x4f0] sm:$0xff]
    %v477 = vld [vmem:[%s3 + $0x4f8] sm:$0xff]
    %v478 = vld [vmem:[%s3 + $0x500] sm:$0xff]
    %v479 = vld [vmem:[%s3 + $0x508] sm:$0xff]
    %v480 = vld [vmem:[%s3 + $0x510] sm:$0xff]
    %v481 = vld [vmem:[%s3 + $0x518] sm:$0xff]
    %v482 = vld [vmem:[%s3 + $0x520] sm:$0xff]
    %v483 = vld [vmem:[%s3 + $0x528] sm:$0xff]
    %v484 = vld [vmem:[%s3 + $0x530] sm:$0xff]
    %v485 = vld [vmem:[%s3 + $0x538] sm:$0xff]
    %v486 = vld [vmem:[%s3 + $0x540] sm:$0xff]
    %v487 = vld [vmem:[%s3 + $0x548] sm:$0xff]
    %v488 = vld [vmem:[%s3 + $0x550] sm:$0xff]
    %v489 = vld [vmem:[%s3 + $0x558] sm:$0xff]
    %v490 = vld [vmem:[%s3 + $0x560] sm:$0xff]
    %v491 = vld [vmem:[%s3 + $0x568] sm:$0xff]
    %v492 = vld [vmem:[%s3 + $0x570] sm:$0xff]
    %v493 = vld [vmem:[%s3 + $0x578] sm:$0xff]
    %v494 = vld [vmem:[%s3 + $0x580] sm:$0xff]
    %v495 = vld [vmem:[%s3 + $0x588] sm:$0xff]
    %v496 = vld [vmem:[%s3 + $0x590] sm:$0xff]
    %v497 = vld [vmem:[%s3 + $0x598] sm:$0xff]
    %v498 = vld [vmem:[%s3 + $0x5a0] sm:$0xff]
    %v499 = vld [vmem:[%s3 + $0x5a8] sm:$0xff]
    %v500 = vld [vmem:[%s3 + $0x5b0] sm:$0xff]
    %v501 = vld [vmem:[%s3 + $0x5b8] sm:$0xff]
    %v502 = vld [vmem:[%s3 + $0x5c0] sm:$0xff]
    %v503 = vld [vmem:[%s3 + $0x5c8] sm:$0xff]
    %v504 = vld [vmem:[%s3 + $0x5d0] sm:$0xff]
    %v505 = vld [vmem:[%s3 + $0x5d8] sm:$0xff]
    %v506 = vld [vmem:[%s3 + $0x5e0] sm:$0xff]
    %v507 = vld [vmem:[%s3 + $0x5e8] sm:$0xff]
    %v508 = vld [vmem:[%s3 + $0x5f0] sm:$0xff]
    %v509 = vld [vmem:[%s3 + $0x5f8] sm:$0xff]
    %v510 = vld [vmem:[%s3 + $0x600] sm:$0xff]
    %v511 = vld [vmem:[%s3 + $0x608] sm:$0xff]
    %v512 = vld [vmem:[%s3 + $0x610] sm:$0xff]
    %v513 = vld [vmem:[%s3 + $0x618] sm:$0xff]
    %v514 = vld [vmem:[%s3 + $0x620] sm:$0xff]
    %v515 = vld [vmem:[%s3 + $0x628] sm:$0xff]
    %v516 = vld [vmem:[%s3 + $0x630] sm:$0xff]
    %v517 = vld [vmem:[%s3 + $0x638] sm:$0xff]
    %v518 = vld [vmem:[%s3 + $0x640] sm:$0xff]
    %v519 = vld [vmem:[%s3 + $0x648] sm:$0xff]
    %v520 = vld [vmem:[%s3 + $0x650] sm:$0xff]
    %v521 = vld [vmem:[%s3 + $0x658] sm:$0xff]
    %v522 = vld [vmem:[%s3 + $0x660] sm:$0xff]
    %v523 = vld [vmem:[%s3 + $0x668] sm:$0xff]
    %v524 = vld [vmem:[%s3 + $0x670] sm:$0xff]
    %v525 = vld [vmem:[%s3 + $0x678] sm:$0xff]
    %v526 = vld [vmem:[%s3 + $0x680] sm:$0xff]
    %v527 = vld [vmem:[%s3 + $0x688] sm:$0xff]
    %v528 = vld [vmem:[%s3 + $0x690] sm:$0xff]
    %v529 = vld [vmem:[%s3 + $0x698] sm:$0xff]
    %v530 = vld [vmem:[%s3 + $0x6a0] sm:$0xff]
    %v531 = vld [vmem:[%s3 + $0x6a8] sm:$0xff]
    %v532 = vld [vmem:[%s3 + $0x6b0] sm:$0xff]
    %v533 = vld [vmem:[%s3 + $0x6b8] sm:$0xff]
    %v534 = vld [vmem:[%s3 + $0x6c0] sm:$0xff]
    %v535 = vld [vmem:[%s3 + $0x6c8] sm:$0xff]
    %v536 = vld [vmem:[%s3 + $0x6d0] sm:$0xff]
    %v537 = vld [vmem:[%s3 + $0x6d8] sm:$0xff]
    %v538 = vld [vmem:[%s3 + $0x6e0] sm:$0xff]
    %v539 = vld [vmem:[%s3 + $0x6e8] sm:$0xff]
    %v540 = vld [vmem:[%s3 + $0x6f0] sm:$0xff]
    %v541 = vld [vmem:[%s3 + $0x6f8] sm:$0xff]
    %v542 = vld [vmem:[%s3 + $0x700] sm:$0xff]
    %v543 = vld [vmem:[%s3 + $0x708] sm:$0xff]
    %v544 = vld [vmem:[%s3 + $0x710] sm:$0xff]
    %v545 = vld [vmem:[%s3 + $0x718] sm:$0xff]
    %v546 = vld [vmem:[%s3 + $0x720] sm:$0xff]
    %v547 = vld [vmem:[%s3 + $0x728] sm:$0xff]
    %v548 = vld [vmem:[%s3 + $0x730] sm:$0xff]
    %v549 = vld [vmem:[%s3 + $0x738] sm:$0xff]
    %v550 = vld [vmem:[%s3 + $0x740] sm:$0xff]
    %v551 = vld [vmem:[%s3 + $0x748] sm:$0xff]
    %v552 = vld [vmem:[%s3 + $0x750] sm:$0xff]
    %v553 = vld [vmem:[%s3 + $0x758] sm:$0xff]
    %v554 = vld [vmem:[%s3 + $0x760] sm:$0xff]
    %v555 = vld [vmem:[%s3 + $0x768] sm:$0xff]
    %v556 = vld [vmem:[%s3 + $0x770] sm:$0xff]
    %v557 = vld [vmem:[%s3 + $0x778] sm:$0xff]
    %v558 = vld [vmem:[%s3 + $0x780] sm:$0xff]
    %v559 = vld [vmem:[%s3 + $0x788] sm:$0xff]
    %v560 = vld [vmem:[%s3 + $0x790] sm:$0xff]
    %v561 = vld [vmem:[%s3 + $0x798] sm:$0xff]
    %v562 = vld [vmem:[%s3 + $0x7a0] sm:$0xff]
    %v563 = vld [vmem:[%s3 + $0x7a8] sm:$0xff]
    %v564 = vld [vmem:[%s3 + $0x7b0] sm:$0xff]
    %v565 = vld [vmem:[%s3 + $0x7b8] sm:$0xff]
    %v566 = vld [vmem:[%s3 + $0x7c0] sm:$0xff]
    %v567 = vld [vmem:[%s3 + $0x7c8] sm:$0xff]
    %v568 = vld [vmem:[%s3 + $0x7d0] sm:$0xff]
    %v569 = vld [vmem:[%s3 + $0x7d8] sm:$0xff]
    %v570 = vld [vmem:[%s3 + $0x7e0] sm:$0xff]
    %v571 = vld [vmem:[%s3 + $0x7e8] sm:$0xff]
    %v572 = vld [vmem:[%s3 + $0x7f0] sm:$0xff]
    %v573 = vld [vmem:[%s3 + $0x7f8] sm:$0xff]
    %v574 = vld [vmem:[%s3 + $0x800] sm:$0xff]
    %v575 = vld [vmem:[%s3 + $0x808] sm:$0xff]
    %v576 = vld [vmem:[%s3 + $0x810] sm:$0xff]
    %v577 = vld [vmem:[%s3 + $0x818] sm:$0xff]
    %v578 = vld [vmem:[%s3 + $0x820] sm:$0xff]
    %v579 = vld [vmem:[%s3 + $0x828] sm:$0xff]
    %v580 = vld [vmem:[%s3 + $0x830] sm:$0xff]
    %v581 = vld [vmem:[%s3 + $0x838] sm:$0xff]
    %v582 = vld [vmem:[%s3 + $0x840] sm:$0xff]
    %v583 = vld [vmem:[%s3 + $0x848] sm:$0xff]
    %v584 = vld [vmem:[%s3 + $0x850] sm:$0xff]
    %v585 = vld [vmem:[%s3 + $0x858] sm:$0xff]
    %v586 = vld [vmem:[%s3 + $0x860] sm:$0xff]
    %v587 = vld [vmem:[%s3 + $0x868] sm:$0xff]
    %v588 = vld [vmem:[%s3 + $0x870] sm:$0xff]
    %v589 = vld [vmem:[%s3 + $0x878] sm:$0xff]
    %v590 = vld [vmem:[%s3 + $0x880] sm:$0xff]
    %v591 = vld [vmem:[%s3 + $0x888] sm:$0xff]
    %v592 = vld [vmem:[%s3 + $0x890] sm:$0xff]
    %v593 = vld [vmem:[%s3 + $0x898] sm:$0xff]
    %v594 = vld [vmem:[%s3 + $0x8a0] sm:$0xff]
    %v595 = vld [vmem:[%s3 + $0x8a8] sm:$0xff]
    %v596 = vld [vmem:[%s3 + $0x8b0] sm:$0xff]
    %v597 = vld [vmem:[%s3 + $0x8b8] sm:$0xff]
    %v598 = vld [vmem:[%s3 + $0x8c0] sm:$0xff]
    %v599 = vld [vmem:[%s3 + $0x8c8] sm:$0xff]
    %v600 = vld [vmem:[%s3 + $0x8d0] sm:$0xff]
    %v601 = vld [vmem:[%s3 + $0x8d8] sm:$0xff]
    %v602 = vld [vmem:[%s3 + $0x8e0] sm:$0xff]
    %v603 = vld [vmem:[%s3 + $0x8e8] sm:$0xff]
    %v604 = vld [vmem:[%s3 + $0x8f0] sm:$0xff]
    %v605 = vld [vmem:[%s3 + $0x8f8] sm:$0xff]
    %v606 = vld [vmem:[%s3 + $0x900] sm:$0xff]
    %v607 = vld [vmem:[%s3 + $0x908] sm:$0xff]
    %v608 = vld [vmem:[%s3 + $0x910] sm:$0xff]
    %v609 = vld [vmem:[%s3 + $0x918] sm:$0xff]
    %v610 = vld [vmem:[%s3 + $0x920] sm:$0xff]
    %v611 = vld [vmem:[%s3 + $0x928] sm:$0xff]
    %v612 = vld [vmem:[%s3 + $0x930] sm:$0xff]
    %v613 = vld [vmem:[%s3 + $0x938] sm:$0xff]
    %v614 = vld [vmem:[%s3 + $0x940] sm:$0xff]
    %v615 = vld [vmem:[%s3 + $0x948] sm:$0xff]
    %v616 = vld [vmem:[%s3 + $0x950] sm:$0xff]
    %v617 = vld [vmem:[%s3 + $0x958] sm:$0xff]
    %v618 = vld [vmem:[%s3 + $0x960] sm:$0xff]
    %v619 = vld [vmem:[%s3 + $0x968] sm:$0xff]
    %v620 = vld [vmem:[%s3 + $0x970] sm:$0xff]
    %v621 = vld [vmem:[%s3 + $0x978] sm:$0xff]
    %v622 = vld [vmem:[%s3 + $0x980] sm:$0xff]
    %v623 = vld [vmem:[%s3 + $0x988] sm:$0xff]
    %v624 = vld [vmem:[%s3 + $0x990] sm:$0xff]
    %v625 = vld [vmem:[%s3 + $0x998] sm:$0xff]
    %v626 = vld [vmem:[%s3 + $0x9a0] sm:$0xff]
    %v627 = vld [vmem:[%s3 + $0x9a8] sm:$0xff]
    %v628 = vld [vmem:[%s3 + $0x9b0] sm:$0xff]
    %v629 = vld [vmem:[%s3 + $0x9b8] sm:$0xff]
    %v630 = vld [vmem:[%s3 + $0x9c0] sm:$0xff]
    %v631 = vld [vmem:[%s3 + $0x9c8] sm:$0xff]
    %v632 = vld [vmem:[%s3 + $0x9d0] sm:$0xff]
    %v633 = vld [vmem:[%s3 + $0x9d8] sm:$0xff]
    %v634 = vld [vmem:[%s3 + $0x9e0] sm:$0xff]
    %v635 = vld [vmem:[%s3 + $0x9e8] sm:$0xff]
    %v636 = vld [vmem:[%s3 + $0x9f0] sm:$0xff]
    %v637 = vld [vmem:[%s3 + $0x9f8] sm:$0xff]
    %v638 = vld [vmem:[%s3 + $0xa00] sm:$0xff]
    %v639 = vld [vmem:[%s3 + $0xa08] sm:$0xff]
    %v640 = vld [vmem:[%s3 + $0xa10] sm:$0xff]
    %v641 = vld [vmem:[%s3 + $0xa18] sm:$0xff]
    %v642 = vld [vmem:[%s3 + $0xa20] sm:$0xff]
    %v643 = vld [vmem:[%s3 + $0xa28] sm:$0xff]
    %v644 = vld [vmem:[%s3 + $0xa30] sm:$0xff]
    %v645 = vld [vmem:[%s3 + $0xa38] sm:$0xff]
    %v646 = vld [vmem:[%s3 + $0xa40] sm:$0xff]
    %v647 = vld [vmem:[%s3 + $0xa48] sm:$0xff]
    %v648 = vld [vmem:[%s3 + $0xa50] sm:$0xff]
    %v649 = vld [vmem:[%s3 + $0xa58] sm:$0xff]
    %v650 = vld [vmem:[%s3 + $0xa60] sm:$0xff]
    %v651 = vld [vmem:[%s3 + $0xa68] sm:$0xff]
    %v652 = vld [vmem:[%s3 + $0xa70] sm:$0xff]
    %v653 = vld [vmem:[%s3 + $0xa78] sm:$0xff]
    %v654 = vld [vmem:[%s3 + $0xa80] sm:$0xff]
    %v655 = vld [vmem:[%s3 + $0xa88] sm:$0xff]
    %v656 = vld [vmem:[%s3 + $0xa90] sm:$0xff]
    %v657 = vld [vmem:[%s3 + $0xa98] sm:$0xff]
    %v658 = vld [vmem:[%s3 + $0xaa0] sm:$0xff]
    %v659 = vld [vmem:[%s3 + $0xaa8] sm:$0xff]
    %v660 = vld [vmem:[%s3 + $0xab0] sm:$0xff]
    %v661 = vld [vmem:[%s3 + $0xab8] sm:$0xff]
    %v662 = vld [vmem:[%s3 + $0xac0] sm:$0xff]
    %v663 = vld [vmem:[%s3 + $0xac8] sm:$0xff]
    %v664 = vld [vmem:[%s3 + $0xad0] sm:$0xff]
    %v665 = vld [vmem:[%s3 + $0xad8] sm:$0xff]
    %v666 = vld [vmem:[%s3 + $0xae0] sm:$0xff]
    %v667 = vld [vmem:[%s3 + $0xae8] sm:$0xff]
    %v668 = vld [vmem:[%s3 + $0xaf0] sm:$0xff]
    %v669 = vld [vmem:[%s3 + $0xaf8] sm:$0xff]
    %v670 = vld [vmem:[%s3 + $0xb00] sm:$0xff]
    %v671 = vld [vmem:[%s3 + $0xb08] sm:$0xff]
    %v672 = vld [vmem:[%s3 + $0xb10] sm:$0xff]
    %v673 = vld [vmem:[%s3 + $0xb18] sm:$0xff]
    %v674 = vld [vmem:[%s3 + $0xb20] sm:$0xff]
    %v675 = vld [vmem:[%s3 + $0xb28] sm:$0xff]
    %v676 = vld [vmem:[%s3 + $0xb30] sm:$0xff]
    %v677 = vld [vmem:[%s3 + $0xb38] sm:$0xff]
    %v678 = vld [vmem:[%s3 + $0xb40] sm:$0xff]
    %v679 = vld [vmem:[%s3 + $0xb48] sm:$0xff]
    %v680 = vld [vmem:[%s3 + $0xb50] sm:$0xff]
    %v681 = vld [vmem:[%s3 + $0xb58] sm:$0xff]
    %v682 = vld [vmem:[%s3 + $0xb60] sm:$0xff]
    %v683 = vld [vmem:[%s3 + $0xb68] sm:$0xff]
    %v684 = vld [vmem:[%s3 + $0xb70] sm:$0xff]
    %v685 = vld [vmem:[%s3 + $0xb78] sm:$0xff]
    %v686 = vld [vmem:[%s3 + $0xb80] sm:$0xff]
    %v687 = vld [vmem:[%s3 + $0xb88] sm:$0xff]
    %v688 = vld [vmem:[%s3 + $0xb90] sm:$0xff]
    %v689 = vld [vmem:[%s3 + $0xb98] sm:$0xff]
    %v690 = vld [vmem:[%s3 + $0xba0] sm:$0xff]
    %v691 = vld [vmem:[%s3 + $0xba8] sm:$0xff]
    %v692 = vld [vmem:[%s3 + $0xbb0] sm:$0xff]
    %v693 = vld [vmem:[%s3 + $0xbb8] sm:$0xff]
    %v694 = vld [vmem:[%s3 + $0xbc0] sm:$0xff]
    %v695 = vld [vmem:[%s3 + $0xbc8] sm:$0xff]
    %v696 = vld [vmem:[%s3 + $0xbd0] sm:$0xff]
    %v697 = vld [vmem:[%s3 + $0xbd8] sm:$0xff]
    %v698 = vld [vmem:[%s3 + $0xbe0] sm:$0xff]
    %v699 = vld [vmem:[%s3 + $0xbe8] sm:$0xff]
    %v700 = vld [vmem:[%s3 + $0xbf0] sm:$0xff]
    %v701 = vld [vmem:[%s3 + $0xbf8] sm:$0xff]
    %v702 = vld [vmem:[%s3 + $0xc00] sm:$0xff]
    %v703 = vld [vmem:[%s3 + $0xc08] sm:$0xff]
    %v704 = vld [vmem:[%s3 + $0xc10] sm:$0xff]
    %v705 = vld [vmem:[%s3 + $0xc18] sm:$0xff]
    %v706 = vld [vmem:[%s3 + $0xc20] sm:$0xff]
    %v707 = vld [vmem:[%s3 + $0xc28] sm:$0xff]
    %v708 = vld [vmem:[%s3 + $0xc30] sm:$0xff]
    %v709 = vld [vmem:[%s3 + $0xc38] sm:$0xff]
    %v710 = vld [vmem:[%s3 + $0xc40] sm:$0xff]
    %v711 = vld [vmem:[%s3 + $0xc48] sm:$0xff]
    %v712 = vld [vmem:[%s3 + $0xc50] sm:$0xff]
    %v713 = vld [vmem:[%s3 + $0xc58] sm:$0xff]
    %v714 = vld [vmem:[%s3 + $0xc60] sm:$0xff]
    %v715 = vld [vmem:[%s3 + $0xc68] sm:$0xff]
    %v716 = vld [vmem:[%s3 + $0xc70] sm:$0xff]
    %v717 = vld [vmem:[%s3 + $0xc78] sm:$0xff]
    %v718 = vld [vmem:[%s3 + $0xc80] sm:$0xff]
    %v719 = vld [vmem:[%s3 + $0xc88] sm:$0xff]
    %v720 = vld [vmem:[%s3 + $0xc90] sm:$0xff]
    %v721 = vld [vmem:[%s3 + $0xc98] sm:$0xff]
    %v722 = vld [vmem:[%s3 + $0xca0] sm:$0xff]
    %v723 = vld [vmem:[%s3 + $0xca8] sm:$0xff]
    %v724 = vld [vmem:[%s3 + $0xcb0] sm:$0xff]
    %v725 = vld [vmem:[%s3 + $0xcb8] sm:$0xff]
    %v726 = vld [vmem:[%s3 + $0xcc0] sm:$0xff]
    %v727 = vld [vmem:[%s3 + $0xcc8] sm:$0xff]
    %v728 = vld [vmem:[%s3 + $0xcd0] sm:$0xff]
    %v729 = vld [vmem:[%s3 + $0xcd8] sm:$0xff]
    %v730 = vld [vmem:[%s3 + $0xce0] sm:$0xff]
    %v731 = vld [vmem:[%s3 + $0xce8] sm:$0xff]
    %v732 = vld [vmem:[%s3 + $0xcf0] sm:$0xff]
    %v733 = vld [vmem:[%s3 + $0xcf8] sm:$0xff]
    %v734 = vld [vmem:[%s3 + $0xd00] sm:$0xff]
    %v735 = vld [vmem:[%s3 + $0xd08] sm:$0xff]
    %v736 = vld [vmem:[%s3 + $0xd10] sm:$0xff]
    %v737 = vld [vmem:[%s3 + $0xd18] sm:$0xff]
    %v738 = vld [vmem:[%s3 + $0xd20] sm:$0xff]
    %v739 = vld [vmem:[%s3 + $0xd28] sm:$0xff]
    %v740 = vld [vmem:[%s3 + $0xd30] sm:$0xff]
    %v741 = vld [vmem:[%s3 + $0xd38] sm:$0xff]
    %v742 = vld [vmem:[%s3 + $0xd40] sm:$0xff]
    %v743 = vld [vmem:[%s3 + $0xd48] sm:$0xff]
    %v744 = vld [vmem:[%s3 + $0xd50] sm:$0xff]
    %v745 = vld [vmem:[%s3 + $0xd58] sm:$0xff]
    %v746 = vld [vmem:[%s3 + $0xd60] sm:$0xff]
    %v747 = vld [vmem:[%s3 + $0xd68] sm:$0xff]
    %v748 = vld [vmem:[%s3 + $0xd70] sm:$0xff]
    %v749 = vld [vmem:[%s3 + $0xd78] sm:$0xff]
    %v750 = vld [vmem:[%s3 + $0xd80] sm:$0xff]
    %v751 = vld [vmem:[%s3 + $0xd88] sm:$0xff]
    %v752 = vld [vmem:[%s3 + $0xd90] sm:$0xff]
    %v753 = vld [vmem:[%s3 + $0xd98] sm:$0xff]
    %v754 = vld [vmem:[%s3 + $0xda0] sm:$0xff]
    %v755 = vld [vmem:[%s3 + $0xda8] sm:$0xff]
    %v756 = vld [vmem:[%s3 + $0xdb0] sm:$0xff]
    %v757 = vld [vmem:[%s3 + $0xdb8] sm:$0xff]
    %v758 = vld [vmem:[%s3 + $0xdc0] sm:$0xff]
    %v759 = vld [vmem:[%s3 + $0xdc8] sm:$0xff]
    %v760 = vld [vmem:[%s3 + $0xdd0] sm:$0xff]
    %v761 = vld [vmem:[%s3 + $0xdd8] sm:$0xff]
    %v762 = vld [vmem:[%s3 + $0xde0] sm:$0xff]
    %v763 = vld [vmem:[%s3 + $0xde8] sm:$0xff]
    %v764 = vld [vmem:[%s3 + $0xdf0] sm:$0xff]
    %v765 = vld [vmem:[%s3 + $0xdf8] sm:$0xff]
    %v766 = vld [vmem:[%s3 + $0xe00] sm:$0xff]
    %v767 = vld [vmem:[%s3 + $0xe08] sm:$0xff]
    %v768 = vld [vmem:[%s3 + $0xe10] sm:$0xff]
    %v769 = vld [vmem:[%s3 + $0xe18] sm:$0xff]
    %v770 = vld [vmem:[%s3 + $0xe20] sm:$0xff]
    %v771 = vld [vmem:[%s3 + $0xe28] sm:$0xff]
    %v772 = vld [vmem:[%s3 + $0xe30] sm:$0xff]
    %v773 = vld [vmem:[%s3 + $0xe38] sm:$0xff]
    %v774 = vld [vmem:[%s3 + $0xe40] sm:$0xff]
    %v775 = vld [vmem:[%s3 + $0xe48] sm:$0xff]
    %v776 = vld [vmem:[%s3 + $0xe50] sm:$0xff]
    %v777 = vld [vmem:[%s3 + $0xe58] sm:$0xff]
    %v778 = vld [vmem:[%s3 + $0xe60] sm:$0xff]
    %v779 = vld [vmem:[%s3 + $0xe68] sm:$0xff]
    %v780 = vld [vmem:[%s3 + $0xe70] sm:$0xff]
    %v781 = vld [vmem:[%s3 + $0xe78] sm:$0xff]
    %v782 = vld [vmem:[%s3 + $0xe80] sm:$0xff]
    %v783 = vld [vmem:[%s3 + $0xe88] sm:$0xff]
    %v784 = vld [vmem:[%s3 + $0xe90] sm:$0xff]
    %v785 = vld [vmem:[%s3 + $0xe98] sm:$0xff]
    %v786 = vld [vmem:[%s3 + $0xea0] sm:$0xff]
    %v787 = vld [vmem:[%s3 + $0xea8] sm:$0xff]
    %v788 = vld [vmem:[%s3 + $0xeb0] sm:$0xff]
    %v789 = vld [vmem:[%s3 + $0xeb8] sm:$0xff]
    %v790 = vld [vmem:[%s3 + $0xec0] sm:$0xff]
    %v791 = vld [vmem:[%s3 + $0xec8] sm:$0xff]
    %v792 = vld [vmem:[%s3 + $0xed0] sm:$0xff]
    %v793 = vld [vmem:[%s3 + $0xed8] sm:$0xff]
    %v794 = vld [vmem:[%s3 + $0xee0] sm:$0xff]
    %v795 = vld [vmem:[%s3 + $0xee8] sm:$0xff]
    %v796 = vld [vmem:[%s3 + $0xef0] sm:$0xff]
    %v797 = vld [vmem:[%s3 + $0xef8] sm:$0xff]
    %v798 = vld [vmem:[%s3 + $0xf00] sm:$0xff]
    %v799 = vld [vmem:[%s3 + $0xf08] sm:$0xff]
    %v800 = vld [vmem:[%s3 + $0xf10] sm:$0xff]
    %v801 = vld [vmem:[%s3 + $0xf18] sm:$0xff]
    %v802 = vld [vmem:[%s3 + $0xf20] sm:$0xff]
    %v803 = vld [vmem:[%s3 + $0xf28] sm:$0xff]
    %v804 = vld [vmem:[%s3 + $0xf30] sm:$0xff]
    %v805 = vld [vmem:[%s3 + $0xf38] sm:$0xff]
    %v806 = vld [vmem:[%s3 + $0xf40] sm:$0xff]
    %v807 = vld [vmem:[%s3 + $0xf48] sm:$0xff]
    %v808 = vld [vmem:[%s3 + $0xf50] sm:$0xff]
    %v809 = vld [vmem:[%s3 + $0xf58] sm:$0xff]
    %v810 = vld [vmem:[%s3 + $0xf60] sm:$0xff]
    %v811 = vld [vmem:[%s3 + $0xf68] sm:$0xff]
    %v812 = vld [vmem:[%s3 + $0xf70] sm:$0xff]
    %v813 = vld [vmem:[%s3 + $0xf78] sm:$0xff]
    %v814 = vld [vmem:[%s3 + $0xf80] sm:$0xff]
    %v815 = vld [vmem:[%s3 + $0xf88] sm:$0xff]
    %v816 = vld [vmem:[%s3 + $0xf90] sm:$0xff]
    %v817 = vld [vmem:[%s3 + $0xf98] sm:$0xff]
    %v818 = vld [vmem:[%s3 + $0xfa0] sm:$0xff]
    %v819 = vld [vmem:[%s3 + $0xfa8] sm:$0xff]
    %v820 = vld [vmem:[%s3 + $0xfb0] sm:$0xff]
    %v821 = vld [vmem:[%s3 + $0xfb8] sm:$0xff]
    %v822 = vld [vmem:[%s3 + $0xfc0] sm:$0xff]
    %v823 = vld [vmem:[%s3 + $0xfc8] sm:$0xff]
    %v824 = vld [vmem:[%s3 + $0xfd0] sm:$0xff]
    %v825 = vld [vmem:[%s3 + $0xfd8] sm:$0xff]
    %v826 = vld [vmem:[%s3 + $0xfe0] sm:$0xff]
    %v827 = vld [vmem:[%s3 + $0xfe8] sm:$0xff]
    %v828 = vld [vmem:[%s3 + $0xff0] sm:$0xff]
    %v829 = vld [vmem:[%s3 + $0xff8] sm:$0xff]
    %v830 = vld [vmem:[%s3 + $0x1000] sm:$0xff]
    %v831 = vld [vmem:[%s3 + $0x1008] sm:$0xff]
    %v832 = vld [vmem:[%s3 + $0x1010] sm:$0xff]
    %v833 = vld [vmem:[%s3 + $0x1018] sm:$0xff]
    %v834 = vld [vmem:[%s3 + $0x1020] sm:$0xff]
    %v835 = vld [vmem:[%s3 + $0x1028] sm:$0xff]
    %v836 = vld [vmem:[%s3 + $0x1030] sm:$0xff]
    %v837 = vld [vmem:[%s3 + $0x1038] sm:$0xff]
    %v838 = vld [vmem:[%s3 + $0x1040] sm:$0xff]
    %v839 = vld [vmem:[%s3 + $0x1048] sm:$0xff]
    %v840 = vld [vmem:[%s3 + $0x1050] sm:$0xff]
    %v841 = vld [vmem:[%s3 + $0x1058] sm:$0xff]
    %v842 = vld [vmem:[%s3 + $0x1060] sm:$0xff]
    %v843 = vld [vmem:[%s3 + $0x1068] sm:$0xff]
    %v844 = vld [vmem:[%s3 + $0x1070] sm:$0xff]
    %v845 = vld [vmem:[%s3 + $0x1078] sm:$0xff]
    %v846 = vld [vmem:[%s3 + $0x1080] sm:$0xff]
    %v847 = vld [vmem:[%s3 + $0x1088] sm:$0xff]
    %v848 = vld [vmem:[%s3 + $0x1090] sm:$0xff]
    %v849 = vld [vmem:[%s3 + $0x1098] sm:$0xff]
    %v850 = vld [vmem:[%s3 + $0x10a0] sm:$0xff]
    %v851 = vld [vmem:[%s3 + $0x10a8] sm:$0xff]
    %v852 = vld [vmem:[%s3 + $0x10b0] sm:$0xff]
    %v853 = vld [vmem:[%s3 + $0x10b8] sm:$0xff]
    %v854 = vld [vmem:[%s3 + $0x10c0] sm:$0xff]
    %v855 = vld [vmem:[%s3 + $0x10c8] sm:$0xff]
    %v856 = vld [vmem:[%s3 + $0x10d0] sm:$0xff]
    %v857 = vld [vmem:[%s3 + $0x10d8] sm:$0xff]
    %v858 = vld [vmem:[%s3 + $0x10e0] sm:$0xff]
    %v859 = vld [vmem:[%s3 + $0x10e8] sm:$0xff]
    %v860 = vld [vmem:[%s3 + $0x10f0] sm:$0xff]
    %v861 = vld [vmem:[%s3 + $0x10f8] sm:$0xff]
    %v862 = vld [vmem:[%s3 + $0x1100] sm:$0xff]
    %v863 = vld [vmem:[%s3 + $0x1108] sm:$0xff]
    %v864 = vld [vmem:[%s3 + $0x1110] sm:$0xff]
    %v865 = vld [vmem:[%s3 + $0x1118] sm:$0xff]
    %v866 = vld [vmem:[%s3 + $0x1120] sm:$0xff]
    %v867 = vld [vmem:[%s3 + $0x1128] sm:$0xff]
    %v868 = vld [vmem:[%s3 + $0x1130] sm:$0xff]
    %v869 = vld [vmem:[%s3 + $0x1138] sm:$0xff]
    %v870 = vld [vmem:[%s3 + $0x1140] sm:$0xff]
    %v871 = vld [vmem:[%s3 + $0x1148] sm:$0xff]
    %v872 = vld [vmem:[%s3 + $0x1150] sm:$0xff]
    %v873 = vld [vmem:[%s3 + $0x1158] sm:$0xff]
    %v874 = vld [vmem:[%s3 + $0x1160] sm:$0xff]
    %v875 = vld [vmem:[%s3 + $0x1168] sm:$0xff]
    %v876 = vld [vmem:[%s3 + $0x1170] sm:$0xff]
    %v877 = vld [vmem:[%s3 + $0x1178] sm:$0xff]
    %v878 = vld [vmem:[%s3 + $0x1180] sm:$0xff]
    %v879 = vld [vmem:[%s3 + $0x1188] sm:$0xff]
    %v880 = vld [vmem:[%s3 + $0x1190] sm:$0xff]
    %v881 = vld [vmem:[%s3 + $0x1198] sm:$0xff]
    %v882 = vld [vmem:[%s3 + $0x11a0] sm:$0xff]
    %v883 = vld [vmem:[%s3 + $0x11a8] sm:$0xff]
    %v884 = vld [vmem:[%s3 + $0x11b0] sm:$0xff]
    %v885 = vld [vmem:[%s3 + $0x11b8] sm:$0xff]
    %v886 = vld [vmem:[%s3 + $0x11c0] sm:$0xff]
    %v887 = vld [vmem:[%s3 + $0x11c8] sm:$0xff]
    %v888 = vld [vmem:[%s3 + $0x11d0] sm:$0xff]
    %v889 = vld [vmem:[%s3 + $0x11d8] sm:$0xff]
    %v890 = vld [vmem:[%s3 + $0x11e0] sm:$0xff]
    %v891 = vld [vmem:[%s3 + $0x11e8] sm:$0xff]
    %v892 = vld [vmem:[%s3 + $0x11f0] sm:$0xff]
    %v893 = vld [vmem:[%s3 + $0x11f8] sm:$0xff]
    %v894 = vld [vmem:[%s4] sm:$0xff]
    %v896 = vlaneseq
    %v897 = vshrl.u32 %v896, 7
    %v898 = vsub.s32 0, %v897
    %v899 = vrot.slane %v894, %v898
    %v900 = vlaneseq
    %v901 = vshrl.u32 %v900, 7
    %v902 = vsub.s32 1, %v901
    %v903 = vrot.slane %v894, %v902
    %v904 = vlaneseq
    %v905 = vshrl.u32 %v904, 7
    %v906 = vsub.s32 2, %v905
    %v907 = vrot.slane %v894, %v906
    %v908 = vlaneseq
    %v909 = vshrl.u32 %v908, 7
    %v910 = vsub.s32 3, %v909
    %v911 = vrot.slane %v894, %v910
    %v912 = vlaneseq
    %v913 = vshrl.u32 %v912, 7
    %v914 = vsub.s32 4, %v913
    %v915 = vrot.slane %v894, %v914
    %v916 = vlaneseq
    %v917 = vshrl.u32 %v916, 7
    %v918 = vsub.s32 5, %v917
    %v919 = vrot.slane %v894, %v918
    %v920 = vlaneseq
    %v921 = vshrl.u32 %v920, 7
    %v922 = vsub.s32 6, %v921
    %v923 = vrot.slane %v894, %v922
    %v924 = vlaneseq
    %v925 = vshrl.u32 %v924, 7
    %v926 = vsub.s32 7, %v925
    %v927 = vrot.slane %v894, %v926
    %vm936 = vcmask 523264
    %v938 = vsel %vm936, %v317, 0
    %940 = vmatprep.subr.mxu0 %v319
    %941 = vmatpush1.msra.mxu0 %v318
    %942 = vmatprep.subr.mxu0 %v327
    %943 = vmatpush1.msra.mxu0 %v326
    %944 = vmatprep.subr.mxu0 %v335
    %945 = vmatpush1.msra.mxu0 %v334
    %946 = vmatprep.subr.mxu0 %v343
    %947 = vmatpush1.msra.mxu0 %v342
    %948 = vmatprep.subr.mxu0 %v351
    %949 = vmatpush1.msra.mxu0 %v350
    %950 = vmatprep.subr.mxu0 %v359
    %951 = vmatpush1.msra.mxu0 %v358
    %952 = vmatprep.subr.mxu0 %v367
    %953 = vmatpush1.msra.mxu0 %v366
    %954 = vmatprep.subr.mxu0 %v375
    %955 = vmatpush1.msra.mxu0 %v374
    %956 = vmatprep.subr.mxu0 %v383
    %957 = vmatpush1.msra.mxu0 %v382
    %958 = vmatprep.subr.mxu0 %v391
    %959 = vmatpush1.msra.mxu0 %v390
    %960 = vmatprep.subr.mxu0 %v399
    %961 = vmatpush1.msra.mxu0 %v398
    %962 = vmatprep.subr.mxu0 %v407
    %963 = vmatpush1.msra.mxu0 %v406
    %964 = vmatprep.subr.mxu0 %v415
    %965 = vmatpush1.msra.mxu0 %v414
    %966 = vmatprep.subr.mxu0 %v423
    %967 = vmatpush1.msra.mxu0 %v422
    %968 = vmatprep.subr.mxu0 %v431
    %969 = vmatpush1.msra.mxu0 %v430
    %970 = vmatprep.subr.mxu0 %v439
    %971 = vmatpush1.msra.mxu0 %v438
    %972 = vmatprep.subr.mxu0 %v447
    %973 = vmatpush1.msra.mxu0 %v446
    %974 = vmatprep.subr.mxu0 %v455
    %975 = vmatpush1.msra.mxu0 %v454
    %976 = vmatprep.subr.mxu0 %v463
    %977 = vmatpush1.msra.mxu0 %v462
    %978 = vmatprep.subr.mxu0 %v471
    %979 = vmatpush1.msra.mxu0 %v470
    %980 = vmatprep.subr.mxu0 %v479
    %981 = vmatpush1.msra.mxu0 %v478
    %982 = vmatprep.subr.mxu0 %v487
    %983 = vmatpush1.msra.mxu0 %v486
    %984 = vmatprep.subr.mxu0 %v495
    %985 = vmatpush1.msra.mxu0 %v494
    %986 = vmatprep.subr.mxu0 %v503
    %987 = vmatpush1.msra.mxu0 %v502
    %988 = vmatprep.subr.mxu0 %v511
    %989 = vmatpush1.msra.mxu0 %v510
    %990 = vmatprep.subr.mxu0 %v519
    %991 = vmatpush1.msra.mxu0 %v518
    %992 = vmatprep.subr.mxu0 %v527
    %993 = vmatpush1.msra.mxu0 %v526
    %994 = vmatprep.subr.mxu0 %v535
    %995 = vmatpush1.msra.mxu0 %v534
    %996 = vmatprep.subr.mxu0 %v543
    %997 = vmatpush1.msra.mxu0 %v542
    %998 = vmatprep.subr.mxu0 %v551
    %999 = vmatpush1.msra.mxu0 %v550
    %1000 = vmatprep.subr.mxu0 %v559
    %1001 = vmatpush1.msra.mxu0 %v558
    %1002 = vmatprep.subr.mxu0 %v567
    %1003 = vmatpush1.msra.mxu0 %v566
    %1004 = vmatprep.mubr.f32.mxu0 %v314
    %1005 = vmatmul.mubr.f32.gmra.mrb[0].mxu0 %v313
    %v1006 = vpop.f32.mrb[0].mxu0
    %v1007 = vadd.f32 %v899, %v1006
    %v1008 = vpop.f32.mrb[0].mxu0
    %v1009 = vadd.f32 %v903, %v1008
    %1010 = vdwg.mxu0
    %1011 = vmatprep.subr.mxu0 %v575
    %1012 = vmatpush1.msra.mxu0 %v574
    %1013 = vmatprep.subr.mxu0 %v583
    %1014 = vmatpush1.msra.mxu0 %v582
    %1015 = vmatprep.subr.mxu0 %v591
    %1016 = vmatpush1.msra.mxu0 %v590
    %1017 = vmatprep.subr.mxu0 %v599
    %1018 = vmatpush1.msra.mxu0 %v598
    %1019 = vmatprep.subr.mxu0 %v607
    %1020 = vmatpush1.msra.mxu0 %v606
    %1021 = vmatprep.subr.mxu0 %v615
    %1022 = vmatpush1.msra.mxu0 %v614
    %1023 = vmatprep.subr.mxu0 %v623
    %1024 = vmatpush1.msra.mxu0 %v622
    %1025 = vmatprep.subr.mxu0 %v631
    %1026 = vmatpush1.msra.mxu0 %v630
    %1027 = vmatprep.subr.mxu0 %v639
    %1028 = vmatpush1.msra.mxu0 %v638
    %1029 = vmatprep.subr.mxu0 %v647
    %1030 = vmatpush1.msra.mxu0 %v646
    %1031 = vmatprep.subr.mxu0 %v655
    %1032 = vmatpush1.msra.mxu0 %v654
    %1033 = vmatprep.subr.mxu0 %v663
    %1034 = vmatpush1.msra.mxu0 %v662
    %1035 = vmatprep.subr.mxu0 %v671
    %1036 = vmatpush1.msra.mxu0 %v670
    %1037 = vmatprep.subr.mxu0 %v679
    %1038 = vmatpush1.msra.mxu0 %v678
    %1039 = vmatprep.subr.mxu0 %v687
    %1040 = vmatpush1.msra.mxu0 %v686
    %1041 = vmatprep.subr.mxu0 %v695
    %1042 = vmatpush1.msra.mxu0 %v694
    %1043 = vmatprep.subr.mxu0 %v703
    %1044 = vmatpush1.msra.mxu0 %v702
    %1045 = vmatprep.subr.mxu0 %v711
    %1046 = vmatpush1.msra.mxu0 %v710
    %1047 = vmatprep.subr.mxu0 %v719
    %1048 = vmatpush1.msra.mxu0 %v718
    %1049 = vmatprep.subr.mxu0 %v727
    %1050 = vmatpush1.msra.mxu0 %v726
    %1051 = vmatprep.subr.mxu0 %v735
    %1052 = vmatpush1.msra.mxu0 %v734
    %1053 = vmatprep.subr.mxu0 %v743
    %1054 = vmatpush1.msra.mxu0 %v742
    %1055 = vmatprep.subr.mxu0 %v751
    %1056 = vmatpush1.msra.mxu0 %v750
    %1057 = vmatprep.subr.mxu0 %v759
    %1058 = vmatpush1.msra.mxu0 %v758
    %1059 = vmatprep.subr.mxu0 %v767
    %1060 = vmatpush1.msra.mxu0 %v766
    %1061 = vmatprep.subr.mxu0 %v775
    %1062 = vmatpush1.msra.mxu0 %v774
    %1063 = vmatprep.subr.mxu0 %v783
    %1064 = vmatpush1.msra.mxu0 %v782
    %1065 = vmatprep.subr.mxu0 %v791
    %1066 = vmatpush1.msra.mxu0 %v790
    %1067 = vmatprep.subr.mxu0 %v799
    %1068 = vmatpush1.msra.mxu0 %v798
    %1069 = vmatprep.subr.mxu0 %v807
    %1070 = vmatpush1.msra.mxu0 %v806
    %1071 = vmatprep.subr.mxu0 %v815
    %1072 = vmatpush1.msra.mxu0 %v814
    %1073 = vmatprep.subr.mxu0 %v823
    %1074 = vmatpush1.msra.mxu0 %v822
    %1075 = vmatprep.mubr.f32.mxu0 %v316
    %1076 = vmatmul.mubr.f32.gmra.mrb[0].mxu0 %v315
    %v1077 = vpop.f32.mrb[0].mxu0
    %v1078 = vadd.f32 %v1007, %v1077
    %v1079 = vpop.f32.mrb[0].mxu0
    %v1080 = vadd.f32 %v1009, %v1079
    %1081 = vdwg.mxu0
    %1082 = vmatprep.subr.mxu0 %v831
    %1083 = vmatpush1.msra.mxu0 %v830
    %1084 = vmatprep.subr.mxu0 %v839
    %1085 = vmatpush1.msra.mxu0 %v838
    %1086 = vmatprep.subr.mxu0 %v847
    %1087 = vmatpush1.msra.mxu0 %v846
    %1088 = vmatprep.subr.mxu0 %v855
    %1089 = vmatpush1.msra.mxu0 %v854
    %1090 = vmatprep.subr.mxu0 %v863
    %1091 = vmatpush1.msra.mxu0 %v862
    %1092 = vmatprep.subr.mxu0 %v871
    %1093 = vmatpush1.msra.mxu0 %v870
    %1094 = vmatprep.subr.mxu0 %v879
    %1095 = vmatpush1.msra.mxu0 %v878
    %1096 = vmatprep.subr.mxu0 %v887
    %1097 = vmatpush1.msra.mxu0 %v886
    %1098 = vmatprep.subr.mxu0 0.0
    %1099 = vmatpush1.msra.mxu0 0.0
    %1100 = vmatprep.subr.mxu0 0.0
    %1101 = vmatpush1.msra.mxu0 0.0
    %1102 = vmatprep.subr.mxu0 0.0
    %1103 = vmatpush1.msra.mxu0 0.0
    %1104 = vmatprep.subr.mxu0 0.0
    %1105 = vmatpush1.msra.mxu0 0.0
    %1106 = vmatprep.subr.mxu0 0.0
    %1107 = vmatpush1.msra.mxu0 0.0
    %1108 = vmatprep.subr.mxu0 0.0
    %1109 = vmatpush1.msra.mxu0 0.0
    %1110 = vmatprep.subr.mxu0 0.0
    %1111 = vmatpush1.msra.mxu0 0.0
    %1112 = vmatprep.subr.mxu0 0.0
    %1113 = vmatpush1.msra.mxu0 0.0
    %1114 = vmatprep.subr.mxu0 0.0
    %1115 = vmatpush1.msra.mxu0 0.0
    %1116 = vmatprep.subr.mxu0 0.0
    %1117 = vmatpush1.msra.mxu0 0.0
    %1118 = vmatprep.subr.mxu0 0.0
    %1119 = vmatpush1.msra.mxu0 0.0
    %1120 = vmatprep.subr.mxu0 0.0
    %1121 = vmatpush1.msra.mxu0 0.0
    %1122 = vmatprep.subr.mxu0 0.0
    %1123 = vmatpush1.msra.mxu0 0.0
    %1124 = vmatprep.subr.mxu0 0.0
    %1125 = vmatpush1.msra.mxu0 0.0
    %1126 = vmatprep.subr.mxu0 0.0
    %1127 = vmatpush1.msra.mxu0 0.0
    %1128 = vmatprep.subr.mxu0 0.0
    %1129 = vmatpush1.msra.mxu0 0.0
    %1130 = vmatprep.subr.mxu0 0.0
    %1131 = vmatpush1.msra.mxu0 0.0
    %1132 = vmatprep.subr.mxu0 0.0
    %1133 = vmatpush1.msra.mxu0 0.0
    %1134 = vmatprep.subr.mxu0 0.0
    %1135 = vmatpush1.msra.mxu0 0.0
    %1136 = vmatprep.subr.mxu0 0.0
    %1137 = vmatpush1.msra.mxu0 0.0
    %1138 = vmatprep.subr.mxu0 0.0
    %1139 = vmatpush1.msra.mxu0 0.0
    %1140 = vmatprep.subr.mxu0 0.0
    %1141 = vmatpush1.msra.mxu0 0.0
    %1142 = vmatprep.subr.mxu0 0.0
    %1143 = vmatpush1.msra.mxu0 0.0
    %1144 = vmatprep.subr.mxu0 0.0
    %1145 = vmatpush1.msra.mxu0 0.0
    %1146 = vmatprep.mubr.f32.mxu0 0.0
    %1147 = vmatmul.mubr.f32.gmra.mrb[0].mxu0 %v938
    %v1148 = vpop.f32.mrb[0].mxu0
    %v1149 = vadd.f32 %v1078, %v1148
    %v1150 = vpop.f32.mrb[0].mxu0
    %v1151 = vadd.f32 %v1080, %v1150
    %1152 = vdwg.mxu0
    %1153 = vmatprep.subr.mxu0 %v321
    %1154 = vmatpush1.msra.mxu0 %v320
    %1155 = vmatprep.subr.mxu0 %v329
    %1156 = vmatpush1.msra.mxu0 %v328
    %1157 = vmatprep.subr.mxu0 %v337
    %1158 = vmatpush1.msra.mxu0 %v336
    %1159 = vmatprep.subr.mxu0 %v345
    %1160 = vmatpush1.msra.mxu0 %v344
    %1161 = vmatprep.subr.mxu0 %v353
    %1162 = vmatpush1.msra.mxu0 %v352
    %1163 = vmatprep.subr.mxu0 %v361
    %1164 = vmatpush1.msra.mxu0 %v360
    %1165 = vmatprep.subr.mxu0 %v369
    %1166 = vmatpush1.msra.mxu0 %v368
    %1167 = vmatprep.subr.mxu0 %v377
    %1168 = vmatpush1.msra.mxu0 %v376
    %1169 = vmatprep.subr.mxu0 %v385
    %1170 = vmatpush1.msra.mxu0 %v384
    %1171 = vmatprep.subr.mxu0 %v393
    %1172 = vmatpush1.msra.mxu0 %v392
    %1173 = vmatprep.subr.mxu0 %v401
    %1174 = vmatpush1.msra.mxu0 %v400
    %1175 = vmatprep.subr.mxu0 %v409
    %1176 = vmatpush1.msra.mxu0 %v408
    %1177 = vmatprep.subr.mxu0 %v417
    %1178 = vmatpush1.msra.mxu0 %v416
    %1179 = vmatprep.subr.mxu0 %v425
    %1180 = vmatpush1.msra.mxu0 %v424
    %1181 = vmatprep.subr.mxu0 %v433
    %1182 = vmatpush1.msra.mxu0 %v432
    %1183 = vmatprep.subr.mxu0 %v441
    %1184 = vmatpush1.msra.mxu0 %v440
    %1185 = vmatprep.subr.mxu0 %v449
    %1186 = vmatpush1.msra.mxu0 %v448
    %1187 = vmatprep.subr.mxu0 %v457
    %1188 = vmatpush1.msra.mxu0 %v456
    %1189 = vmatprep.subr.mxu0 %v465
    %1190 = vmatpush1.msra.mxu0 %v464
    %1191 = vmatprep.subr.mxu0 %v473
    %1192 = vmatpush1.msra.mxu0 %v472
    %1193 = vmatprep.subr.mxu0 %v481
    %1194 = vmatpush1.msra.mxu0 %v480
    %1195 = vmatprep.subr.mxu0 %v489
    %1196 = vmatpush1.msra.mxu0 %v488
    %1197 = vmatprep.subr.mxu0 %v497
    %1198 = vmatpush1.msra.mxu0 %v496
    %1199 = vmatprep.subr.mxu0 %v505
    %1200 = vmatpush1.msra.mxu0 %v504
    %1201 = vmatprep.subr.mxu0 %v513
    %1202 = vmatpush1.msra.mxu0 %v512
    %1203 = vmatprep.subr.mxu0 %v521
    %1204 = vmatpush1.msra.mxu0 %v520
    %1205 = vmatprep.subr.mxu0 %v529
    %1206 = vmatpush1.msra.mxu0 %v528
    %1207 = vmatprep.subr.mxu0 %v537
    %1208 = vmatpush1.msra.mxu0 %v536
    %1209 = vmatprep.subr.mxu0 %v545
    %1210 = vmatpush1.msra.mxu0 %v544
    %1211 = vmatprep.subr.mxu0 %v553
    %1212 = vmatpush1.msra.mxu0 %v552
    %1213 = vmatprep.subr.mxu0 %v561
    %1214 = vmatpush1.msra.mxu0 %v560
    %1215 = vmatprep.subr.mxu0 %v569
    %1216 = vmatpush1.msra.mxu0 %v568
    %1217 = vmatprep.mubr.f32.mxu0 %v314
    %1218 = vmatmul.mubr.f32.gmra.mrb[0].mxu0 %v313
    %v1219 = vpop.f32.mrb[0].mxu0
    %v1220 = vadd.f32 %v907, %v1219
    %v1221 = vpop.f32.mrb[0].mxu0
    %v1222 = vadd.f32 %v911, %v1221
    %1223 = vdwg.mxu0
    %1224 = vmatprep.subr.mxu0 %v577
    %1225 = vmatpush1.msra.mxu0 %v576
    %1226 = vmatprep.subr.mxu0 %v585
    %1227 = vmatpush1.msra.mxu0 %v584
    %1228 = vmatprep.subr.mxu0 %v593
    %1229 = vmatpush1.msra.mxu0 %v592
    %1230 = vmatprep.subr.mxu0 %v601
    %1231 = vmatpush1.msra.mxu0 %v600
    %1232 = vmatprep.subr.mxu0 %v609
    %1233 = vmatpush1.msra.mxu0 %v608
    %1234 = vmatprep.subr.mxu0 %v617
    %1235 = vmatpush1.msra.mxu0 %v616
    %1236 = vmatprep.subr.mxu0 %v625
    %1237 = vmatpush1.msra.mxu0 %v624
    %1238 = vmatprep.subr.mxu0 %v633
    %1239 = vmatpush1.msra.mxu0 %v632
    %1240 = vmatprep.subr.mxu0 %v641
    %1241 = vmatpush1.msra.mxu0 %v640
    %1242 = vmatprep.subr.mxu0 %v649
    %1243 = vmatpush1.msra.mxu0 %v648
    %1244 = vmatprep.subr.mxu0 %v657
    %1245 = vmatpush1.msra.mxu0 %v656
    %1246 = vmatprep.subr.mxu0 %v665
    %1247 = vmatpush1.msra.mxu0 %v664
    %1248 = vmatprep.subr.mxu0 %v673
    %1249 = vmatpush1.msra.mxu0 %v672
    %1250 = vmatprep.subr.mxu0 %v681
    %1251 = vmatpush1.msra.mxu0 %v680
    %1252 = vmatprep.subr.mxu0 %v689
    %1253 = vmatpush1.msra.mxu0 %v688
    %1254 = vmatprep.subr.mxu0 %v697
    %1255 = vmatpush1.msra.mxu0 %v696
    %1256 = vmatprep.subr.mxu0 %v705
    %1257 = vmatpush1.msra.mxu0 %v704
    %1258 = vmatprep.subr.mxu0 %v713
    %1259 = vmatpush1.msra.mxu0 %v712
    %1260 = vmatprep.subr.mxu0 %v721
    %1261 = vmatpush1.msra.mxu0 %v720
    %1262 = vmatprep.subr.mxu0 %v729
    %1263 = vmatpush1.msra.mxu0 %v728
    %1264 = vmatprep.subr.mxu0 %v737
    %1265 = vmatpush1.msra.mxu0 %v736
    %1266 = vmatprep.subr.mxu0 %v745
    %1267 = vmatpush1.msra.mxu0 %v744
    %1268 = vmatprep.subr.mxu0 %v753
    %1269 = vmatpush1.msra.mxu0 %v752
    %1270 = vmatprep.subr.mxu0 %v761
    %1271 = vmatpush1.msra.mxu0 %v760
    %1272 = vmatprep.subr.mxu0 %v769
    %1273 = vmatpush1.msra.mxu0 %v768
    %1274 = vmatprep.subr.mxu0 %v777
    %1275 = vmatpush1.msra.mxu0 %v776
    %1276 = vmatprep.subr.mxu0 %v785
    %1277 = vmatpush1.msra.mxu0 %v784
    %1278 = vmatprep.subr.mxu0 %v793
    %1279 = vmatpush1.msra.mxu0 %v792
    %1280 = vmatprep.subr.mxu0 %v801
    %1281 = vmatpush1.msra.mxu0 %v800
    %1282 = vmatprep.subr.mxu0 %v809
    %1283 = vmatpush1.msra.mxu0 %v808
    %1284 = vmatprep.subr.mxu0 %v817
    %1285 = vmatpush1.msra.mxu0 %v816
    %1286 = vmatprep.subr.mxu0 %v825
    %1287 = vmatpush1.msra.mxu0 %v824
    %1288 = vmatprep.mubr.f32.mxu0 %v316
    %1289 = vmatmul.mubr.f32.gmra.mrb[0].mxu0 %v315
    %v1290 = vpop.f32.mrb[0].mxu0
    %v1291 = vadd.f32 %v1220, %v1290
    %v1292 = vpop.f32.mrb[0].mxu0
    %v1293 = vadd.f32 %v1222, %v1292
    %1294 = vdwg.mxu0
    %1295 = vmatprep.subr.mxu0 %v833
    %1296 = vmatpush1.msra.mxu0 %v832
    %1297 = vmatprep.subr.mxu0 %v841
    %1298 = vmatpush1.msra.mxu0 %v840
    %1299 = vmatprep.subr.mxu0 %v849
    %1300 = vmatpush1.msra.mxu0 %v848
    %1301 = vmatprep.subr.mxu0 %v857
    %1302 = vmatpush1.msra.mxu0 %v856
    %1303 = vmatprep.subr.mxu0 %v865
    %1304 = vmatpush1.msra.mxu0 %v864
    %1305 = vmatprep.subr.mxu0 %v873
    %1306 = vmatpush1.msra.mxu0 %v872
    %1307 = vmatprep.subr.mxu0 %v881
    %1308 = vmatpush1.msra.mxu0 %v880
    %1309 = vmatprep.subr.mxu0 %v889
    %1310 = vmatpush1.msra.mxu0 %v888
    %1311 = vmatprep.subr.mxu0 0.0
    %1312 = vmatpush1.msra.mxu0 0.0
    %1313 = vmatprep.subr.mxu0 0.0
    %1314 = vmatpush1.msra.mxu0 0.0
    %1315 = vmatprep.subr.mxu0 0.0
    %1316 = vmatpush1.msra.mxu0 0.0
    %1317 = vmatprep.subr.mxu0 0.0
    %1318 = vmatpush1.msra.mxu0 0.0
    %1319 = vmatprep.subr.mxu0 0.0
    %1320 = vmatpush1.msra.mxu0 0.0
    %1321 = vmatprep.subr.mxu0 0.0
    %1322 = vmatpush1.msra.mxu0 0.0
    %1323 = vmatprep.subr.mxu0 0.0
    %1324 = vmatpush1.msra.mxu0 0.0
    %1325 = vmatprep.subr.mxu0 0.0
    %1326 = vmatpush1.msra.mxu0 0.0
    %1327 = vmatprep.subr.mxu0 0.0
    %1328 = vmatpush1.msra.mxu0 0.0
    %1329 = vmatprep.subr.mxu0 0.0
    %1330 = vmatpush1.msra.mxu0 0.0
    %1331 = vmatprep.subr.mxu0 0.0
    %1332 = vmatpush1.msra.mxu0 0.0
    %1333 = vmatprep.subr.mxu0 0.0
    %1334 = vmatpush1.msra.mxu0 0.0
    %1335 = vmatprep.subr.mxu0 0.0
    %1336 = vmatpush1.msra.mxu0 0.0
    %1337 = vmatprep.subr.mxu0 0.0
    %1338 = vmatpush1.msra.mxu0 0.0
    %1339 = vmatprep.subr.mxu0 0.0
    %1340 = vmatpush1.msra.mxu0 0.0
    %1341 = vmatprep.subr.mxu0 0.0
    %1342 = vmatpush1.msra.mxu0 0.0
    %1343 = vmatprep.subr.mxu0 0.0
    %1344 = vmatpush1.msra.mxu0 0.0
    %1345 = vmatprep.subr.mxu0 0.0
    %1346 = vmatpush1.msra.mxu0 0.0
    %1347 = vmatprep.subr.mxu0 0.0
    %1348 = vmatpush1.msra.mxu0 0.0
    %1349 = vmatprep.subr.mxu0 0.0
    %1350 = vmatpush1.msra.mxu0 0.0
    %1351 = vmatprep.subr.mxu0 0.0
    %1352 = vmatpush1.msra.mxu0 0.0
    %1353 = vmatprep.subr.mxu0 0.0
    %1354 = vmatpush1.msra.mxu0 0.0
    %1355 = vmatprep.subr.mxu0 0.0
    %1356 = vmatpush1.msra.mxu0 0.0
    %1357 = vmatprep.subr.mxu0 0.0
    %1358 = vmatpush1.msra.mxu0 0.0
    %1359 = vmatprep.mubr.f32.mxu0 0.0
    %1360 = vmatmul.mubr.f32.gmra.mrb[0].mxu0 %v938
    %v1361 = vpop.f32.mrb[0].mxu0
    %v1362 = vadd.f32 %v1291, %v1361
    %v1363 = vpop.f32.mrb[0].mxu0
    %v1364 = vadd.f32 %v1293, %v1363
    %1365 = vdwg.mxu0
    %1366 = vmatprep.subr.mxu0 %v323
    %1367 = vmatpush1.msra.mxu0 %v322
    %1368 = vmatprep.subr.mxu0 %v331
    %1369 = vmatpush1.msra.mxu0 %v330
    %1370 = vmatprep.subr.mxu0 %v339
    %1371 = vmatpush1.msra.mxu0 %v338
    %1372 = vmatprep.subr.mxu0 %v347
    %1373 = vmatpush1.msra.mxu0 %v346
    %1374 = vmatprep.subr.mxu0 %v355
    %1375 = vmatpush1.msra.mxu0 %v354
    %1376 = vmatprep.subr.mxu0 %v363
    %1377 = vmatpush1.msra.mxu0 %v362
    %1378 = vmatprep.subr.mxu0 %v371
    %1379 = vmatpush1.msra.mxu0 %v370
    %1380 = vmatprep.subr.mxu0 %v379
    %1381 = vmatpush1.msra.mxu0 %v378
    %1382 = vmatprep.subr.mxu0 %v387
    %1383 = vmatpush1.msra.mxu0 %v386
    %1384 = vmatprep.subr.mxu0 %v395
    %1385 = vmatpush1.msra.mxu0 %v394
    %1386 = vmatprep.subr.mxu0 %v403
    %1387 = vmatpush1.msra.mxu0 %v402
    %1388 = vmatprep.subr.mxu0 %v411
    %1389 = vmatpush1.msra.mxu0 %v410
    %1390 = vmatprep.subr.mxu0 %v419
    %1391 = vmatpush1.msra.mxu0 %v418
    %1392 = vmatprep.subr.mxu0 %v427
    %1393 = vmatpush1.msra.mxu0 %v426
    %1394 = vmatprep.subr.mxu0 %v435
    %1395 = vmatpush1.msra.mxu0 %v434
    %1396 = vmatprep.subr.mxu0 %v443
    %1397 = vmatpush1.msra.mxu0 %v442
    %1398 = vmatprep.subr.mxu0 %v451
    %1399 = vmatpush1.msra.mxu0 %v450
    %1400 = vmatprep.subr.mxu0 %v459
    %1401 = vmatpush1.msra.mxu0 %v458
    %1402 = vmatprep.subr.mxu0 %v467
    %1403 = vmatpush1.msra.mxu0 %v466
    %1404 = vmatprep.subr.mxu0 %v475
    %1405 = vmatpush1.msra.mxu0 %v474
    %1406 = vmatprep.subr.mxu0 %v483
    %1407 = vmatpush1.msra.mxu0 %v482
    %1408 = vmatprep.subr.mxu0 %v491
    %1409 = vmatpush1.msra.mxu0 %v490
    %1410 = vmatprep.subr.mxu0 %v499
    %1411 = vmatpush1.msra.mxu0 %v498
    %1412 = vmatprep.subr.mxu0 %v507
    %1413 = vmatpush1.msra.mxu0 %v506
    %1414 = vmatprep.subr.mxu0 %v515
    %1415 = vmatpush1.msra.mxu0 %v514
    %1416 = vmatprep.subr.mxu0 %v523
    %1417 = vmatpush1.msra.mxu0 %v522
    %1418 = vmatprep.subr.mxu0 %v531
    %1419 = vmatpush1.msra.mxu0 %v530
    %1420 = vmatprep.subr.mxu0 %v539
    %1421 = vmatpush1.msra.mxu0 %v538
    %1422 = vmatprep.subr.mxu0 %v547
    %1423 = vmatpush1.msra.mxu0 %v546
    %1424 = vmatprep.subr.mxu0 %v555
    %1425 = vmatpush1.msra.mxu0 %v554
    %1426 = vmatprep.subr.mxu0 %v563
    %1427 = vmatpush1.msra.mxu0 %v562
    %1428 = vmatprep.subr.mxu0 %v571
    %1429 = vmatpush1.msra.mxu0 %v570
    %1430 = vmatprep.mubr.f32.mxu0 %v314
    %1431 = vmatmul.mubr.f32.gmra.mrb[0].mxu0 %v313
    %v1432 = vpop.f32.mrb[0].mxu0
    %v1433 = vadd.f32 %v915, %v1432
    %v1434 = vpop.f32.mrb[0].mxu0
    %v1435 = vadd.f32 %v919, %v1434
    %1436 = vdwg.mxu0
    %1437 = vmatprep.subr.mxu0 %v579
    %1438 = vmatpush1.msra.mxu0 %v578
    %1439 = vmatprep.subr.mxu0 %v587
    %1440 = vmatpush1.msra.mxu0 %v586
    %1441 = vmatprep.subr.mxu0 %v595
    %1442 = vmatpush1.msra.mxu0 %v594
    %1443 = vmatprep.subr.mxu0 %v603
    %1444 = vmatpush1.msra.mxu0 %v602
    %1445 = vmatprep.subr.mxu0 %v611
    %1446 = vmatpush1.msra.mxu0 %v610
    %1447 = vmatprep.subr.mxu0 %v619
    %1448 = vmatpush1.msra.mxu0 %v618
    %1449 = vmatprep.subr.mxu0 %v627
    %1450 = vmatpush1.msra.mxu0 %v626
    %1451 = vmatprep.subr.mxu0 %v635
    %1452 = vmatpush1.msra.mxu0 %v634
    %1453 = vmatprep.subr.mxu0 %v643
    %1454 = vmatpush1.msra.mxu0 %v642
    %1455 = vmatprep.subr.mxu0 %v651
    %1456 = vmatpush1.msra.mxu0 %v650
    %1457 = vmatprep.subr.mxu0 %v659
    %1458 = vmatpush1.msra.mxu0 %v658
    %1459 = vmatprep.subr.mxu0 %v667
    %1460 = vmatpush1.msra.mxu0 %v666
    %1461 = vmatprep.subr.mxu0 %v675
    %1462 = vmatpush1.msra.mxu0 %v674
    %1463 = vmatprep.subr.mxu0 %v683
    %1464 = vmatpush1.msra.mxu0 %v682
    %1465 = vmatprep.subr.mxu0 %v691
    %1466 = vmatpush1.msra.mxu0 %v690
    %1467 = vmatprep.subr.mxu0 %v699
    %1468 = vmatpush1.msra.mxu0 %v698
    %1469 = vmatprep.subr.mxu0 %v707
    %1470 = vmatpush1.msra.mxu0 %v706
    %1471 = vmatprep.subr.mxu0 %v715
    %1472 = vmatpush1.msra.mxu0 %v714
    %1473 = vmatprep.subr.mxu0 %v723
    %1474 = vmatpush1.msra.mxu0 %v722
    %1475 = vmatprep.subr.mxu0 %v731
    %1476 = vmatpush1.msra.mxu0 %v730
    %1477 = vmatprep.subr.mxu0 %v739
    %1478 = vmatpush1.msra.mxu0 %v738
    %1479 = vmatprep.subr.mxu0 %v747
    %1480 = vmatpush1.msra.mxu0 %v746
    %1481 = vmatprep.subr.mxu0 %v755
    %1482 = vmatpush1.msra.mxu0 %v754
    %1483 = vmatprep.subr.mxu0 %v763
    %1484 = vmatpush1.msra.mxu0 %v762
    %1485 = vmatprep.subr.mxu0 %v771
    %1486 = vmatpush1.msra.mxu0 %v770
    %1487 = vmatprep.subr.mxu0 %v779
    %1488 = vmatpush1.msra.mxu0 %v778
    %1489 = vmatprep.subr.mxu0 %v787
    %1490 = vmatpush1.msra.mxu0 %v786
    %1491 = vmatprep.subr.mxu0 %v795
    %1492 = vmatpush1.msra.mxu0 %v794
    %1493 = vmatprep.subr.mxu0 %v803
    %1494 = vmatpush1.msra.mxu0 %v802
    %1495 = vmatprep.subr.mxu0 %v811
    %1496 = vmatpush1.msra.mxu0 %v810
    %1497 = vmatprep.subr.mxu0 %v819
    %1498 = vmatpush1.msra.mxu0 %v818
    %1499 = vmatprep.subr.mxu0 %v827
    %1500 = vmatpush1.msra.mxu0 %v826
    %1501 = vmatprep.mubr.f32.mxu0 %v316
    %1502 = vmatmul.mubr.f32.gmra.mrb[0].mxu0 %v315
    %v1503 = vpop.f32.mrb[0].mxu0
    %v1504 = vadd.f32 %v1433, %v1503
    %v1505 = vpop.f32.mrb[0].mxu0
    %v1506 = vadd.f32 %v1435, %v1505
    %1507 = vdwg.mxu0
    %1508 = vmatprep.subr.mxu0 %v835
    %1509 = vmatpush1.msra.mxu0 %v834
    %1510 = vmatprep.subr.mxu0 %v843
    %1511 = vmatpush1.msra.mxu0 %v842
    %1512 = vmatprep.subr.mxu0 %v851
    %1513 = vmatpush1.msra.mxu0 %v850
    %1514 = vmatprep.subr.mxu0 %v859
    %1515 = vmatpush1.msra.mxu0 %v858
    %1516 = vmatprep.subr.mxu0 %v867
    %1517 = vmatpush1.msra.mxu0 %v866
    %1518 = vmatprep.subr.mxu0 %v875
    %1519 = vmatpush1.msra.mxu0 %v874
    %1520 = vmatprep.subr.mxu0 %v883
    %1521 = vmatpush1.msra.mxu0 %v882
    %1522 = vmatprep.subr.mxu0 %v891
    %1523 = vmatpush1.msra.mxu0 %v890
    %1524 = vmatprep.subr.mxu0 0.0
    %1525 = vmatpush1.msra.mxu0 0.0
    %1526 = vmatprep.subr.mxu0 0.0
    %1527 = vmatpush1.msra.mxu0 0.0
    %1528 = vmatprep.subr.mxu0 0.0
    %1529 = vmatpush1.msra.mxu0 0.0
    %1530 = vmatprep.subr.mxu0 0.0
    %1531 = vmatpush1.msra.mxu0 0.0
    %1532 = vmatprep.subr.mxu0 0.0
    %1533 = vmatpush1.msra.mxu0 0.0
    %1534 = vmatprep.subr.mxu0 0.0
    %1535 = vmatpush1.msra.mxu0 0.0
    %1536 = vmatprep.subr.mxu0 0.0
    %1537 = vmatpush1.msra.mxu0 0.0
    %1538 = vmatprep.subr.mxu0 0.0
    %1539 = vmatpush1.msra.mxu0 0.0
    %1540 = vmatprep.subr.mxu0 0.0
    %1541 = vmatpush1.msra.mxu0 0.0
    %1542 = vmatprep.subr.mxu0 0.0
    %1543 = vmatpush1.msra.mxu0 0.0
    %1544 = vmatprep.subr.mxu0 0.0
    %1545 = vmatpush1.msra.mxu0 0.0
    %1546 = vmatprep.subr.mxu0 0.0
    %1547 = vmatpush1.msra.mxu0 0.0
    %1548 = vmatprep.subr.mxu0 0.0
    %1549 = vmatpush1.msra.mxu0 0.0
    %1550 = vmatprep.subr.mxu0 0.0
    %1551 = vmatpush1.msra.mxu0 0.0
    %1552 = vmatprep.subr.mxu0 0.0
    %1553 = vmatpush1.msra.mxu0 0.0
    %1554 = vmatprep.subr.mxu0 0.0
    %1555 = vmatpush1.msra.mxu0 0.0
    %1556 = vmatprep.subr.mxu0 0.0
    %1557 = vmatpush1.msra.mxu0 0.0
    %1558 = vmatprep.subr.mxu0 0.0
    %1559 = vmatpush1.msra.mxu0 0.0
    %1560 = vmatprep.subr.mxu0 0.0
    %1561 = vmatpush1.msra.mxu0 0.0
    %1562 = vmatprep.subr.mxu0 0.0
    %1563 = vmatpush1.msra.mxu0 0.0
    %1564 = vmatprep.subr.mxu0 0.0
    %1565 = vmatpush1.msra.mxu0 0.0
    %1566 = vmatprep.subr.mxu0 0.0
    %1567 = vmatpush1.msra.mxu0 0.0
    %1568 = vmatprep.subr.mxu0 0.0
    %1569 = vmatpush1.msra.mxu0 0.0
    %1570 = vmatprep.subr.mxu0 0.0
    %1571 = vmatpush1.msra.mxu0 0.0
    %1572 = vmatprep.mubr.f32.mxu0 0.0
    %1573 = vmatmul.mubr.f32.gmra.mrb[0].mxu0 %v938
    %v1574 = vpop.f32.mrb[0].mxu0
    %v1575 = vadd.f32 %v1504, %v1574
    %v1576 = vpop.f32.mrb[0].mxu0
    %v1577 = vadd.f32 %v1506, %v1576
    %1578 = vdwg.mxu0
    %1579 = vmatprep.subr.mxu0 %v325
    %1580 = vmatpush1.msra.mxu0 %v324
    %1581 = vmatprep.subr.mxu0 %v333
    %1582 = vmatpush1.msra.mxu0 %v332
    %1583 = vmatprep.subr.mxu0 %v341
    %1584 = vmatpush1.msra.mxu0 %v340
    %1585 = vmatprep.subr.mxu0 %v349
    %1586 = vmatpush1.msra.mxu0 %v348
    %1587 = vmatprep.subr.mxu0 %v357
    %1588 = vmatpush1.msra.mxu0 %v356
    %1589 = vmatprep.subr.mxu0 %v365
    %1590 = vmatpush1.msra.mxu0 %v364
    %1591 = vmatprep.subr.mxu0 %v373
    %1592 = vmatpush1.msra.mxu0 %v372
    %1593 = vmatprep.subr.mxu0 %v381
    %1594 = vmatpush1.msra.mxu0 %v380
    %1595 = vmatprep.subr.mxu0 %v389
    %1596 = vmatpush1.msra.mxu0 %v388
    %1597 = vmatprep.subr.mxu0 %v397
    %1598 = vmatpush1.msra.mxu0 %v396
    %1599 = vmatprep.subr.mxu0 %v405
    %1600 = vmatpush1.msra.mxu0 %v404
    %1601 = vmatprep.subr.mxu0 %v413
    %1602 = vmatpush1.msra.mxu0 %v412
    %1603 = vmatprep.subr.mxu0 %v421
    %1604 = vmatpush1.msra.mxu0 %v420
    %1605 = vmatprep.subr.mxu0 %v429
    %1606 = vmatpush1.msra.mxu0 %v428
    %1607 = vmatprep.subr.mxu0 %v437
    %1608 = vmatpush1.msra.mxu0 %v436
    %1609 = vmatprep.subr.mxu0 %v445
    %1610 = vmatpush1.msra.mxu0 %v444
    %1611 = vmatprep.subr.mxu0 %v453
    %1612 = vmatpush1.msra.mxu0 %v452
    %1613 = vmatprep.subr.mxu0 %v461
    %1614 = vmatpush1.msra.mxu0 %v460
    %1615 = vmatprep.subr.mxu0 %v469
    %1616 = vmatpush1.msra.mxu0 %v468
    %1617 = vmatprep.subr.mxu0 %v477
    %1618 = vmatpush1.msra.mxu0 %v476
    %1619 = vmatprep.subr.mxu0 %v485
    %1620 = vmatpush1.msra.mxu0 %v484
    %1621 = vmatprep.subr.mxu0 %v493
    %1622 = vmatpush1.msra.mxu0 %v492
    %1623 = vmatprep.subr.mxu0 %v501
    %1624 = vmatpush1.msra.mxu0 %v500
    %1625 = vmatprep.subr.mxu0 %v509
    %1626 = vmatpush1.msra.mxu0 %v508
    %1627 = vmatprep.subr.mxu0 %v517
    %1628 = vmatpush1.msra.mxu0 %v516
    %1629 = vmatprep.subr.mxu0 %v525
    %1630 = vmatpush1.msra.mxu0 %v524
    %1631 = vmatprep.subr.mxu0 %v533
    %1632 = vmatpush1.msra.mxu0 %v532
    %1633 = vmatprep.subr.mxu0 %v541
    %1634 = vmatpush1.msra.mxu0 %v540
    %1635 = vmatprep.subr.mxu0 %v549
    %1636 = vmatpush1.msra.mxu0 %v548
    %1637 = vmatprep.subr.mxu0 %v557
    %1638 = vmatpush1.msra.mxu0 %v556
    %1639 = vmatprep.subr.mxu0 %v565
    %1640 = vmatpush1.msra.mxu0 %v564
    %1641 = vmatprep.subr.mxu0 %v573
    %1642 = vmatpush1.msra.mxu0 %v572
    %1643 = vmatprep.mubr.f32.mxu0 %v314
    %1644 = vmatmul.mubr.f32.gmra.mrb[0].mxu0 %v313
    %v1645 = vpop.f32.mrb[0].mxu0
    %v1646 = vadd.f32 %v923, %v1645
    %v1647 = vpop.f32.mrb[0].mxu0
    %v1648 = vadd.f32 %v927, %v1647
    %1649 = vdwg.mxu0
    %1650 = vmatprep.subr.mxu0 %v581
    %1651 = vmatpush1.msra.mxu0 %v580
    %1652 = vmatprep.subr.mxu0 %v589
    %1653 = vmatpush1.msra.mxu0 %v588
    %1654 = vmatprep.subr.mxu0 %v597
    %1655 = vmatpush1.msra.mxu0 %v596
    %1656 = vmatprep.subr.mxu0 %v605
    %1657 = vmatpush1.msra.mxu0 %v604
    %1658 = vmatprep.subr.mxu0 %v613
    %1659 = vmatpush1.msra.mxu0 %v612
    %1660 = vmatprep.subr.mxu0 %v621
    %1661 = vmatpush1.msra.mxu0 %v620
    %1662 = vmatprep.subr.mxu0 %v629
    %1663 = vmatpush1.msra.mxu0 %v628
    %1664 = vmatprep.subr.mxu0 %v637
    %1665 = vmatpush1.msra.mxu0 %v636
    %1666 = vmatprep.subr.mxu0 %v645
    %1667 = vmatpush1.msra.mxu0 %v644
    %1668 = vmatprep.subr.mxu0 %v653
    %1669 = vmatpush1.msra.mxu0 %v652
    %1670 = vmatprep.subr.mxu0 %v661
    %1671 = vmatpush1.msra.mxu0 %v660
    %1672 = vmatprep.subr.mxu0 %v669
    %1673 = vmatpush1.msra.mxu0 %v668
    %1674 = vmatprep.subr.mxu0 %v677
    %1675 = vmatpush1.msra.mxu0 %v676
    %1676 = vmatprep.subr.mxu0 %v685
    %1677 = vmatpush1.msra.mxu0 %v684
    %1678 = vmatprep.subr.mxu0 %v693
    %1679 = vmatpush1.msra.mxu0 %v692
    %1680 = vmatprep.subr.mxu0 %v701
    %1681 = vmatpush1.msra.mxu0 %v700
    %1682 = vmatprep.subr.mxu0 %v709
    %1683 = vmatpush1.msra.mxu0 %v708
    %1684 = vmatprep.subr.mxu0 %v717
    %1685 = vmatpush1.msra.mxu0 %v716
    %1686 = vmatprep.subr.mxu0 %v725
    %1687 = vmatpush1.msra.mxu0 %v724
    %1688 = vmatprep.subr.mxu0 %v733
    %1689 = vmatpush1.msra.mxu0 %v732
    %1690 = vmatprep.subr.mxu0 %v741
    %1691 = vmatpush1.msra.mxu0 %v740
    %1692 = vmatprep.subr.mxu0 %v749
    %1693 = vmatpush1.msra.mxu0 %v748
    %1694 = vmatprep.subr.mxu0 %v757
    %1695 = vmatpush1.msra.mxu0 %v756
    %1696 = vmatprep.subr.mxu0 %v765
    %1697 = vmatpush1.msra.mxu0 %v764
    %1698 = vmatprep.subr.mxu0 %v773
    %1699 = vmatpush1.msra.mxu0 %v772
    %1700 = vmatprep.subr.mxu0 %v781
    %1701 = vmatpush1.msra.mxu0 %v780
    %1702 = vmatprep.subr.mxu0 %v789
    %1703 = vmatpush1.msra.mxu0 %v788
    %1704 = vmatprep.subr.mxu0 %v797
    %1705 = vmatpush1.msra.mxu0 %v796
    %1706 = vmatprep.subr.mxu0 %v805
    %1707 = vmatpush1.msra.mxu0 %v804
    %1708 = vmatprep.subr.mxu0 %v813
    %1709 = vmatpush1.msra.mxu0 %v812
    %1710 = vmatprep.subr.mxu0 %v821
    %1711 = vmatpush1.msra.mxu0 %v820
    %1712 = vmatprep.subr.mxu0 %v829
    %1713 = vmatpush1.msra.mxu0 %v828
    %1714 = vmatprep.mubr.f32.mxu0 %v316
    %1715 = vmatmul.mubr.f32.gmra.mrb[0].mxu0 %v315
    %v1716 = vpop.f32.mrb[0].mxu0
    %v1717 = vadd.f32 %v1646, %v1716
    %v1718 = vpop.f32.mrb[0].mxu0
    %v1719 = vadd.f32 %v1648, %v1718
    %1720 = vdwg.mxu0
    %1721 = vmatprep.subr.mxu0 %v837
    %1722 = vmatpush1.msra.mxu0 %v836
    %1723 = vmatprep.subr.mxu0 %v845
    %1724 = vmatpush1.msra.mxu0 %v844
    %1725 = vmatprep.subr.mxu0 %v853
    %1726 = vmatpush1.msra.mxu0 %v852
    %1727 = vmatprep.subr.mxu0 %v861
    %1728 = vmatpush1.msra.mxu0 %v860
    %1729 = vmatprep.subr.mxu0 %v869
    %1730 = vmatpush1.msra.mxu0 %v868
    %1731 = vmatprep.subr.mxu0 %v877
    %1732 = vmatpush1.msra.mxu0 %v876
    %1733 = vmatprep.subr.mxu0 %v885
    %1734 = vmatpush1.msra.mxu0 %v884
    %1735 = vmatprep.subr.mxu0 %v893
    %1736 = vmatpush1.msra.mxu0 %v892
    %1737 = vmatprep.subr.mxu0 0.0
    %1738 = vmatpush1.msra.mxu0 0.0
    %1739 = vmatprep.subr.mxu0 0.0
    %1740 = vmatpush1.msra.mxu0 0.0
    %1741 = vmatprep.subr.mxu0 0.0
    %1742 = vmatpush1.msra.mxu0 0.0
    %1743 = vmatprep.subr.mxu0 0.0
    %1744 = vmatpush1.msra.mxu0 0.0
    %1745 = vmatprep.subr.mxu0 0.0
    %1746 = vmatpush1.msra.mxu0 0.0
    %1747 = vmatprep.subr.mxu0 0.0
    %1748 = vmatpush1.msra.mxu0 0.0
    %1749 = vmatprep.subr.mxu0 0.0
    %1750 = vmatpush1.msra.mxu0 0.0
    %1751 = vmatprep.subr.mxu0 0.0
    %1752 = vmatpush1.msra.mxu0 0.0
    %1753 = vmatprep.subr.mxu0 0.0
    %1754 = vmatpush1.msra.mxu0 0.0
    %1755 = vmatprep.subr.mxu0 0.0
    %1756 = vmatpush1.msra.mxu0 0.0
    %1757 = vmatprep.subr.mxu0 0.0
    %1758 = vmatpush1.msra.mxu0 0.0
    %1759 = vmatprep.subr.mxu0 0.0
    %1760 = vmatpush1.msra.mxu0 0.0
    %1761 = vmatprep.subr.mxu0 0.0
    %1762 = vmatpush1.msra.mxu0 0.0
    %1763 = vmatprep.subr.mxu0 0.0
    %1764 = vmatpush1.msra.mxu0 0.0
    %1765 = vmatprep.subr.mxu0 0.0
    %1766 = vmatpush1.msra.mxu0 0.0
    %1767 = vmatprep.subr.mxu0 0.0
    %1768 = vmatpush1.msra.mxu0 0.0
    %1769 = vmatprep.subr.mxu0 0.0
    %1770 = vmatpush1.msra.mxu0 0.0
    %1771 = vmatprep.subr.mxu0 0.0
    %1772 = vmatpush1.msra.mxu0 0.0
    %1773 = vmatprep.subr.mxu0 0.0
    %1774 = vmatpush1.msra.mxu0 0.0
    %1775 = vmatprep.subr.mxu0 0.0
    %1776 = vmatpush1.msra.mxu0 0.0
    %1777 = vmatprep.subr.mxu0 0.0
    %1778 = vmatpush1.msra.mxu0 0.0
    %1779 = vmatprep.subr.mxu0 0.0
    %1780 = vmatpush1.msra.mxu0 0.0
    %1781 = vmatprep.subr.mxu0 0.0
    %1782 = vmatpush1.msra.mxu0 0.0
    %1783 = vmatprep.subr.mxu0 0.0
    %1784 = vmatpush1.msra.mxu0 0.0
    %1785 = vmatprep.mubr.f32.mxu0 0.0
    %1786 = vmatmul.mubr.f32.gmra.mrb[0].mxu0 %v938
    %v1787 = vpop.f32.mrb[0].mxu0
    %v1788 = vadd.f32 %v1717, %v1787
    %v1789 = vpop.f32.mrb[0].mxu0
    %v1790 = vadd.f32 %v1719, %v1789
    %1791 = vdwg.mxu0
    %v1792 = vmax.f32 %v1149, 0.0
    %v1793 = vmax.f32 %v1151, 0.0
    %v1794 = vmax.f32 %v1362, 0.0
    %v1795 = vmax.f32 %v1364, 0.0
    %v1796 = vmax.f32 %v1575, 0.0
    %v1797 = vmax.f32 %v1577, 0.0
    %v1798 = vmax.f32 %v1788, 0.0
    %v1799 = vmax.f32 %v1790, 0.0
    %v1800 = vmax.f32 %v1792, %v1796
    %v1801 = vmax.f32 %v1793, %v1797
    %v1802 = vmax.f32 %v1794, %v1798
    %v1803 = vmax.f32 %v1795, %v1799
    %v1804 = vmax.f32 %v1800, %v1802
    %v1805 = vmax.f32 %v1801, %v1803
    %v1806 = vmax.f32 %v1804, %v1805
    %1808 = vrot.lane.b32.xlu0 %v1806, 64
    %v1809 = vpop.permute.xlu0 %1808
    %v1811 = vmax.f32 %v1806, %v1809
    %v1812 = vld [vmem:[%s5] sm:$0xff]
    %v1813 = vld [vmem:[%s5 + $0x8] sm:$0xff]
    %v1814 = vld [vmem:[%s5 + $0x10] sm:$0xff]
    %v1815 = vld [vmem:[%s5 + $0x18] sm:$0xff]
    %v1816 = vld [vmem:[%s5 + $0x20] sm:$0xff]
    %v1817 = vld [vmem:[%s5 + $0x28] sm:$0xff]
    %v1818 = vld [vmem:[%s5 + $0x30] sm:$0xff]
    %v1819 = vld [vmem:[%s5 + $0x38] sm:$0xff]
    %v1820 = vld [vmem:[%s6] sm:$0x1]
    %v1822 = vlaneseq
    %v1823 = vshrl.u32 %v1822, 7
    %v1824 = vsub.s32 0, %v1823
    %v1825 = vrot.slane %v1820, %v1824
    %v1828 = vsel %vm936, %v1811, 0
    %1830 = vmatprep.subr.mxu0 0.0
    %1831 = vmatpush1.msra.mxu0 %v1812
    %1832 = vmatprep.subr.mxu0 0.0
    %1833 = vmatpush1.msra.mxu0 %v1813
    %1834 = vmatprep.subr.mxu0 0.0
    %1835 = vmatpush1.msra.mxu0 %v1814
    %1836 = vmatprep.subr.mxu0 0.0
    %1837 = vmatpush1.msra.mxu0 %v1815
    %1838 = vmatprep.subr.mxu0 0.0
    %1839 = vmatpush1.msra.mxu0 %v1816
    %1840 = vmatprep.subr.mxu0 0.0
    %1841 = vmatpush1.msra.mxu0 %v1817
    %1842 = vmatprep.subr.mxu0 0.0
    %1843 = vmatpush1.msra.mxu0 %v1818
    %1844 = vmatprep.subr.mxu0 0.0
    %1845 = vmatpush1.msra.mxu0 %v1819
    %1846 = vmatprep.subr.mxu0 0.0
    %1847 = vmatpush1.msra.mxu0 0.0
    %1848 = vmatprep.subr.mxu0 0.0
    %1849 = vmatpush1.msra.mxu0 0.0
    %1850 = vmatprep.subr.mxu0 0.0
    %1851 = vmatpush1.msra.mxu0 0.0
    %1852 = vmatprep.subr.mxu0 0.0
    %1853 = vmatpush1.msra.mxu0 0.0
    %1854 = vmatprep.subr.mxu0 0.0
    %1855 = vmatpush1.msra.mxu0 0.0
    %1856 = vmatprep.subr.mxu0 0.0
    %1857 = vmatpush1.msra.mxu0 0.0
    %1858 = vmatprep.subr.mxu0 0.0
    %1859 = vmatpush1.msra.mxu0 0.0
    %1860 = vmatprep.subr.mxu0 0.0
    %1861 = vmatpush1.msra.mxu0 0.0
    %1862 = vmatprep.subr.mxu0 0.0
    %1863 = vmatpush1.msra.mxu0 0.0
    %1864 = vmatprep.subr.mxu0 0.0
    %1865 = vmatpush1.msra.mxu0 0.0
    %1866 = vmatprep.subr.mxu0 0.0
    %1867 = vmatpush1.msra.mxu0 0.0
    %1868 = vmatprep.subr.mxu0 0.0
    %1869 = vmatpush1.msra.mxu0 0.0
    %1870 = vmatprep.subr.mxu0 0.0
    %1871 = vmatpush1.msra.mxu0 0.0
    %1872 = vmatprep.subr.mxu0 0.0
    %1873 = vmatpush1.msra.mxu0 0.0
    %1874 = vmatprep.subr.mxu0 0.0
    %1875 = vmatpush1.msra.mxu0 0.0
    %1876 = vmatprep.subr.mxu0 0.0
    %1877 = vmatpush1.msra.mxu0 0.0
    %1878 = vmatprep.subr.mxu0 0.0
    %1879 = vmatpush1.msra.mxu0 0.0
    %1880 = vmatprep.subr.mxu0 0.0
    %1881 = vmatpush1.msra.mxu0 0.0
    %1882 = vmatprep.subr.mxu0 0.0
    %1883 = vmatpush1.msra.mxu0 0.0
    %1884 = vmatprep.subr.mxu0 0.0
    %1885 = vmatpush1.msra.mxu0 0.0
    %1886 = vmatprep.subr.mxu0 0.0
    %1887 = vmatpush1.msra.mxu0 0.0
    %1888 = vmatprep.subr.mxu0 0.0
    %1889 = vmatpush1.msra.mxu0 0.0
    %1890 = vmatprep.subr.mxu0 0.0
    %1891 = vmatpush1.msra.mxu0 0.0
    %1892 = vmatprep.subr.mxu0 0.0
    %1893 = vmatpush1.msra.mxu0 0.0
    %1894 = vmatprep.mubr.f32.mxu0 0.0
    %1895 = vmatmul.mubr.f32.gmra.mrb[0].mxu0 %v1828
    %v1896 = vpop.f32.mrb[0].mxu0
    %v1897 = vadd.f32 %v1825, %v1896
    %v1898 = vpop.f32.mrb[0].mxu0
    %1899 = vdwg.mxu0
    %v1900 = vxor.u32 %v1897, 2147483648
    %v1901 = vmul.f32 %v1900, 1.442695
    %v1902 = vpow.pop %v1901
    %v1903 = vadd.f32 %v1902, 1.0
    %v1904 = vrcp.pop %v1903
    %v1905 = vmul.f32 1.0, %v1904
    %v1906 = vld [vmem:[%s7] sm:$0xff]
    %v1907 = vld [vmem:[%s7 + $0x8] sm:$0xff]
    %v1908 = vld [vmem:[%s7 + $0x10] sm:$0xff]
    %v1909 = vld [vmem:[%s7 + $0x18] sm:$0xff]
    %v1910 = vld [vmem:[%s7 + $0x20] sm:$0xff]
    %v1911 = vld [vmem:[%s7 + $0x28] sm:$0xff]
    %v1912 = vld [vmem:[%s7 + $0x30] sm:$0xff]
    %v1913 = vld [vmem:[%s7 + $0x38] sm:$0xff]
    %v1914 = vld [vmem:[%s8] sm:$0x1]
    %v1916 = vlaneseq
    %v1917 = vshrl.u32 %v1916, 7
    %v1918 = vsub.s32 0, %v1917
    %v1919 = vrot.slane %v1914, %v1918
    %1921 = vmatprep.subr.mxu0 0.0
    %1922 = vmatpush1.msra.mxu0 %v1906
    %1923 = vmatprep.subr.mxu0 0.0
    %1924 = vmatpush1.msra.mxu0 %v1907
    %1925 = vmatprep.subr.mxu0 0.0
    %1926 = vmatpush1.msra.mxu0 %v1908
    %1927 = vmatprep.subr.mxu0 0.0
    %1928 = vmatpush1.msra.mxu0 %v1909
    %1929 = vmatprep.subr.mxu0 0.0
    %1930 = vmatpush1.msra.mxu0 %v1910
    %1931 = vmatprep.subr.mxu0 0.0
    %1932 = vmatpush1.msra.mxu0 %v1911
    %1933 = vmatprep.subr.mxu0 0.0
    %1934 = vmatpush1.msra.mxu0 %v1912
    %1935 = vmatprep.subr.mxu0 0.0
    %1936 = vmatpush1.msra.mxu0 %v1913
    %1937 = vmatprep.subr.mxu0 0.0
    %1938 = vmatpush1.msra.mxu0 0.0
    %1939 = vmatprep.subr.mxu0 0.0
    %1940 = vmatpush1.msra.mxu0 0.0
    %1941 = vmatprep.subr.mxu0 0.0
    %1942 = vmatpush1.msra.mxu0 0.0
    %1943 = vmatprep.subr.mxu0 0.0
    %1944 = vmatpush1.msra.mxu0 0.0
    %1945 = vmatprep.subr.mxu0 0.0
    %1946 = vmatpush1.msra.mxu0 0.0
    %1947 = vmatprep.subr.mxu0 0.0
    %1948 = vmatpush1.msra.mxu0 0.0
    %1949 = vmatprep.subr.mxu0 0.0
    %1950 = vmatpush1.msra.mxu0 0.0
    %1951 = vmatprep.subr.mxu0 0.0
    %1952 = vmatpush1.msra.mxu0 0.0
    %1953 = vmatprep.subr.mxu0 0.0
    %1954 = vmatpush1.msra.mxu0 0.0
    %1955 = vmatprep.subr.mxu0 0.0
    %1956 = vmatpush1.msra.mxu0 0.0
    %1957 = vmatprep.subr.mxu0 0.0
    %1958 = vmatpush1.msra.mxu0 0.0
    %1959 = vmatprep.subr.mxu0 0.0
    %1960 = vmatpush1.msra.mxu0 0.0
    %1961 = vmatprep.subr.mxu0 0.0
    %1962 = vmatpush1.msra.mxu0 0.0
    %1963 = vmatprep.subr.mxu0 0.0
    %1964 = vmatpush1.msra.mxu0 0.0
    %1965 = vmatprep.subr.mxu0 0.0
    %1966 = vmatpush1.msra.mxu0 0.0
    %1967 = vmatprep.subr.mxu0 0.0
    %1968 = vmatpush1.msra.mxu0 0.0
    %1969 = vmatprep.subr.mxu0 0.0
    %1970 = vmatpush1.msra.mxu0 0.0
    %1971 = vmatprep.subr.mxu0 0.0
    %1972 = vmatpush1.msra.mxu0 0.0
    %1973 = vmatprep.subr.mxu0 0.0
    %1974 = vmatpush1.msra.mxu0 0.0
    %1975 = vmatprep.subr.mxu0 0.0
    %1976 = vmatpush1.msra.mxu0 0.0
    %1977 = vmatprep.subr.mxu0 0.0
    %1978 = vmatpush1.msra.mxu0 0.0
    %1979 = vmatprep.subr.mxu0 0.0
    %1980 = vmatpush1.msra.mxu0 0.0
    %1981 = vmatprep.subr.mxu0 0.0
    %1982 = vmatpush1.msra.mxu0 0.0
    %1983 = vmatprep.subr.mxu0 0.0
    %1984 = vmatpush1.msra.mxu0 0.0
    %1985 = vmatprep.mubr.f32.mxu0 0.0
    %1986 = vmatmul.mubr.f32.gmra.mrb[0].mxu0 %v1828
    %v1987 = vpop.f32.mrb[0].mxu0
    %v1988 = vadd.f32 %v1919, %v1987
    %v1989 = vpop.f32.mrb[0].mxu0
    %1990 = vdwg.mxu0
    %v1991 = vmax.f32 %v1988, 0.0
    %v1992 = vmul.f32 %v1905, %v1991
    %v1993 = vsub.f32 1.0, %v1905
    %v1994 = vmul.f32 %v1993, %v1811
    %v1995 = vadd.f32 %v1992, %v1994
    %1996 = vst.msk [vmem:[#allocation2] sm:$0xff] %vm936, %v1995
    // Predicated region
    $region38: #{model_embeddings_forward.1} parent=1 // pred_check
      _
    $region39: #{model_embeddings_forward.1} parent=1 // pred_check_branch
      %1998 = sbr.rel (0) target = $region41
    $region40: #{model_embeddings_forward.1} parent=1 // pred_region
      %s2000 = ssub.s32 128, 128
      %2001 = vsyncadd [#allocation3], %s2000
      %s2003 = sshll.u32 [#allocation2], 4
      %s2004 = int_to_ptr.vmem [resolvable:$true] %s2003
      %2006 = dma.vmem_to_hbm [thread:$0]  %s2004, 128, %s9, [#allocation3]
    $region41: #{model_embeddings_forward.1} parent=1 // pred_fallthru
      _
    // Predicated region
    $region42: #{model_embeddings_forward.1} parent=1 // pred_check
      _
    $region43: #{model_embeddings_forward.1} parent=1 // pred_check_branch
      %2008 = sbr.rel (0) target = $region45
    $region44: #{model_embeddings_forward.1} parent=1 // pred_region
      %2009 = dma.done [#allocation3], 128
    $region45: #{model_embeddings_forward.1} parent=1 // pred_fallthru
      _
    %2010 = vsyncpa [#allocation3], 1

</llo_original>
